<compile_context>
chip_gen: v5e
topology: v5e:2x2
jax: 0.10.0
libtpu: 0.0.40
codegen_flags: <defaults>
</compile_context>

<pallas_src>
import math

import jax
import jax.numpy as jnp
from jax.experimental import pallas as pl
from jax.experimental.pallas import tpu as pltpu

EPS = 1e-5
HIDDEN = 64


def value_net_kernel(x_ref, w1_ref, w2_ref, small_ref, o_ref):
    small = small_ref[...]                        # (8, 64) f32, packed params
    b1, g1, be1 = small[0:1, :], small[1:2, :], small[2:3, :]
    b2, g2, be2 = small[3:4, :], small[4:5, :], small[5:6, :]
    w3_row = small[6:7, :]                        # (1, 64)
    b3 = small[7:8, 0:1]                          # (1, 1)

    # ---- Linear(F, 64): bf16 operands (cast in-kernel), f32 accumulation ----
    xb = x_ref[...].astype(jnp.bfloat16)          # (B, F)
    h = jnp.dot(xb, w1_ref[...], preferred_element_type=jnp.float32)
    h = jnp.maximum(h + b1, 0.0)                  # bias + ReLU, (B, 64) f32

    # ---- BatchNorm1d(64), training mode (batch mean, biased variance) ------
    m = jnp.mean(h, axis=0, keepdims=True)
    v = jnp.mean((h - m) * (h - m), axis=0, keepdims=True)
    h = g1 * (h - m) * jax.lax.rsqrt(v + EPS) + be1

    # ---- Linear(64, 64) + ReLU ----------------------------------------------
    h = jnp.dot(h, w2_ref[...], preferred_element_type=jnp.float32) + b2
    h = jnp.maximum(h, 0.0)

    # ---- BatchNorm1d(64) ------------------------------------------------------
    m = jnp.mean(h, axis=0, keepdims=True)
    v = jnp.mean((h - m) * (h - m), axis=0, keepdims=True)
    h = g2 * (h - m) * jax.lax.rsqrt(v + EPS) + be2

    # ---- Linear(64, 1): VPU multiply + lane reduction --------------------------
    o_ref[...] = jnp.sum(h * w3_row, axis=-1, keepdims=True) + b3


def prepare_params(params):
    """One-time host-side prep: cast the big matmul weight to bf16 and pack
    the small per-feature params into a single (8, 64) f32 array."""
    w1 = params["w1"].astype(jnp.bfloat16)        # (F, 64), unpadded
    w2 = params["w2"].astype(jnp.float32)         # (64, 64)
    small = jnp.concatenate(
        [params["b1"], params["g1"], params["be1"],
         params["b2"], params["g2"], params["be2"],
         params["w3"].reshape(1, HIDDEN),
         jnp.broadcast_to(params["b3"].reshape(1, 1), (1, HIDDEN))],
        axis=0).astype(jnp.float32)               # (8, 64)
    return {"w1": w1, "w2": w2, "small": small}


@jax.jit
def value_network_forward(x, prepared):
    """x: (B, F) float32, unpadded.  prepared: output of prepare_params()."""
    B, F = x.shape
    w1, w2, small = prepared["w1"], prepared["w2"], prepared["small"]

    cost = pl.CostEstimate(
        flops=2 * B * F * HIDDEN + 2 * B * HIDDEN * HIDDEN + 2 * B * HIDDEN,
        transcendentals=2 * HIDDEN,               # two rsqrt over (1, 64)
        bytes_accessed=(B * F * 4                 # x (f32 in HBM)
                        + F * HIDDEN * 2          # w1 (bf16)
                        + HIDDEN * HIDDEN * 4     # w2
                        + 8 * HIDDEN * 4          # packed small params
                        + B * 4),                 # output
    )

    return pl.pallas_call(
        value_net_kernel,
        out_shape=jax.ShapeDtypeStruct((B, 1), jnp.float32),
        in_specs=[
            pl.BlockSpec((B, F), lambda: (0, 0)),             # x, full array
            pl.BlockSpec((F, HIDDEN), lambda: (0, 0)),        # w1, full array
            pl.BlockSpec((HIDDEN, HIDDEN), lambda: (0, 0)),   # w2
            pl.BlockSpec((8, HIDDEN), lambda: (0, 0)),        # packed params
        ],
        out_specs=pl.BlockSpec((B, 1), lambda: (0, 0)),
        cost_estimate=cost,
    )(x, w1, w2, small)


def init_params(key, input_shape):
    """Deterministic init matching PyTorch defaults.

    nn.Linear: U(-1/sqrt(fan_in), 1/sqrt(fan_in)) for weight and bias.
    nn.BatchNorm1d: gamma=1, beta=0.
    Weights stored as (fan_in, fan_out) so the kernel does x @ W.
    """
    ks = jax.random.split(key, 6)

    def lin(kw, kb, fan_in, fan_out):
        bound = 1.0 / math.sqrt(fan_in)
        w = jax.random.uniform(kw, (fan_in, fan_out), jnp.float32, -bound, bound)
        b = jax.random.uniform(kb, (1, fan_out), jnp.float32, -bound, bound)
        return w, b

    w1, b1 = lin(ks[0], ks[1], input_shape, HIDDEN)
    w2, b2 = lin(ks[2], ks[3], HIDDEN, HIDDEN)
    w3, b3 = lin(ks[4], ks[5], HIDDEN, 1)

    return dict(
        w1=w1, b1=b1,
        g1=jnp.ones((1, HIDDEN), jnp.float32), be1=jnp.zeros((1, HIDDEN), jnp.float32),
        w2=w2, b2=b2,
        g2=jnp.ones((1, HIDDEN), jnp.float32), be2=jnp.zeros((1, HIDDEN), jnp.float32),
        w3=w3, b3=b3,
    )


def reference_forward(x, p):
    """Pure-JAX reference: same bf16 rounding of x/w1 as the kernel's first
    matmul, full f32 everywhere else (precision=HIGHEST)."""
    hi = jax.lax.Precision.HIGHEST
    xb = x.astype(jnp.bfloat16).astype(jnp.float32)
    w1b = p["w1"].astype(jnp.bfloat16).astype(jnp.float32)
    h = jnp.maximum(jnp.dot(xb, w1b, precision=hi) + p["b1"], 0.0)
    m = h.mean(0, keepdims=True)
    v = ((h - m) ** 2).mean(0, keepdims=True)
    h = p["g1"] * (h - m) / jnp.sqrt(v + EPS) + p["be1"]
    h = jnp.maximum(jnp.dot(h, p["w2"], precision=hi) + p["b2"], 0.0)
    m = h.mean(0, keepdims=True)
    v = ((h - m) ** 2).mean(0, keepdims=True)
    h = p["g2"] * (h - m) / jnp.sqrt(v + EPS) + p["be2"]
    return jnp.dot(h, p["w3"], precision=hi) + p["b3"]


if __name__ == "__main__":
    INPUT_SHAPE = 3023   # as in the original script
    BATCH = 8            # small batch (>1, required for training-mode BN)

    key = jax.random.PRNGKey(0)
    kx, kp = jax.random.split(key)
    x = jax.random.normal(kx, (BATCH, INPUT_SHAPE), jnp.float32)
    params = init_params(kp, INPUT_SHAPE)
    prepared = prepare_params(params)

    out = jax.block_until_ready(value_network_forward(x, prepared))

    ref = reference_forward(x, params)
    assert out.shape == (BATCH, 1)
    assert jnp.allclose(out, ref, atol=2e-3, rtol=2e-3), "mismatch vs JAX reference"

    print("KERNEL_OK")
</pallas_src>

<mosaic_0001>
module attributes {stable_mosaic.version = 11 : i64} {
  func.func @value_net_kernel(%arg0: memref<8x3023xf32, #tpu.memory_space<vmem>>, %arg1: memref<3023x64xbf16, #tpu.memory_space<vmem>>, %arg2: memref<64x64xf32, #tpu.memory_space<vmem>>, %arg3: memref<8x64xf32, #tpu.memory_space<vmem>>, %arg4: memref<8x1xf32, #tpu.memory_space<vmem>>) attributes {dimension_semantics = [], scalar_prefetch = 0 : i64, scratch_operands = 0 : i64, tpu.core_type = #tpu.core_type<tc>} {
    %c0 = arith.constant 0 : index
    %c0_0 = arith.constant 0 : index
    %0 = vector.load %arg3[%c0, %c0_0] : memref<8x64xf32, #tpu.memory_space<vmem>>, vector<8x64xf32>
    %1 = vector.extract_strided_slice %0 {offsets = [0, 0], sizes = [1, 64], strides = [1, 1]} : vector<8x64xf32> to vector<1x64xf32>
    %2 = vector.extract_strided_slice %0 {offsets = [1, 0], sizes = [1, 64], strides = [1, 1]} : vector<8x64xf32> to vector<1x64xf32>
    %3 = vector.extract_strided_slice %0 {offsets = [2, 0], sizes = [1, 64], strides = [1, 1]} : vector<8x64xf32> to vector<1x64xf32>
    %4 = vector.extract_strided_slice %0 {offsets = [3, 0], sizes = [1, 64], strides = [1, 1]} : vector<8x64xf32> to vector<1x64xf32>
    %5 = vector.extract_strided_slice %0 {offsets = [4, 0], sizes = [1, 64], strides = [1, 1]} : vector<8x64xf32> to vector<1x64xf32>
    %6 = vector.extract_strided_slice %0 {offsets = [5, 0], sizes = [1, 64], strides = [1, 1]} : vector<8x64xf32> to vector<1x64xf32>
    %7 = vector.extract_strided_slice %0 {offsets = [6, 0], sizes = [1, 64], strides = [1, 1]} : vector<8x64xf32> to vector<1x64xf32>
    %8 = vector.extract_strided_slice %0 {offsets = [7, 0], sizes = [1, 1], strides = [1, 1]} : vector<8x64xf32> to vector<1x1xf32>
    %c0_1 = arith.constant 0 : index
    %c0_2 = arith.constant 0 : index
    %9 = vector.load %arg0[%c0_1, %c0_2] : memref<8x3023xf32, #tpu.memory_space<vmem>>, vector<8x3023xf32>
    %10 = arith.truncf %9 : vector<8x3023xf32> to vector<8x3023xbf16>
    %c0_3 = arith.constant 0 : index
    %c0_4 = arith.constant 0 : index
    %11 = vector.load %arg1[%c0_3, %c0_4] : memref<3023x64xbf16, #tpu.memory_space<vmem>>, vector<3023x64xbf16>
    %cst = arith.constant dense<0.000000e+00> : vector<8x64xf32>
    %12 = tpu.matmul %10, %11, %cst {dimension_numbers = #tpu.dot_dimension_numbers<[1], [0], [0], [1], [0, 0, 1, 1], [], []>} : vector<8x3023xbf16>, vector<3023x64xbf16>, vector<8x64xf32> -> vector<8x64xf32>
    %13 = vector.broadcast %1 : vector<1x64xf32> to vector<8x64xf32>
    %14 = arith.addf %12, %13 : vector<8x64xf32>
    %cst_5 = arith.constant 0.000000e+00 : f32
    %15 = vector.broadcast %cst_5 : f32 to vector<8x64xf32>
    %16 = arith.maximumf %14, %15 : vector<8x64xf32>
    %cst_6 = arith.constant dense<0.000000e+00> : vector<64xf32>
    %17 = vector.multi_reduction <add>, %16, %cst_6 [0] : vector<8x64xf32> to vector<64xf32>
    %18 = vector.shape_cast %17 : vector<64xf32> to vector<1x64xf32>
    %cst_7 = arith.constant 8.000000e+00 : f32
    %19 = vector.broadcast %cst_7 : f32 to vector<1x64xf32>
    %20 = arith.divf %18, %19 : vector<1x64xf32>
    %21 = vector.broadcast %20 : vector<1x64xf32> to vector<8x64xf32>
    %22 = arith.subf %16, %21 : vector<8x64xf32>
    %23 = vector.broadcast %20 : vector<1x64xf32> to vector<8x64xf32>
    %24 = arith.subf %16, %23 : vector<8x64xf32>
    %25 = arith.mulf %22, %24 : vector<8x64xf32>
    %cst_8 = arith.constant dense<0.000000e+00> : vector<64xf32>
    %26 = vector.multi_reduction <add>, %25, %cst_8 [0] : vector<8x64xf32> to vector<64xf32>
    %27 = vector.shape_cast %26 : vector<64xf32> to vector<1x64xf32>
    %cst_9 = arith.constant 8.000000e+00 : f32
    %28 = vector.broadcast %cst_9 : f32 to vector<1x64xf32>
    %29 = arith.divf %27, %28 : vector<1x64xf32>
    %30 = vector.broadcast %20 : vector<1x64xf32> to vector<8x64xf32>
    %31 = arith.subf %16, %30 : vector<8x64xf32>
    %32 = vector.broadcast %2 : vector<1x64xf32> to vector<8x64xf32>
    %33 = arith.mulf %32, %31 : vector<8x64xf32>
    %cst_10 = arith.constant 9.99999974E-6 : f32
    %34 = vector.broadcast %cst_10 : f32 to vector<1x64xf32>
    %35 = arith.addf %29, %34 : vector<1x64xf32>
    %36 = math.rsqrt %35 : vector<1x64xf32>
    %37 = vector.broadcast %36 : vector<1x64xf32> to vector<8x64xf32>
    %38 = arith.mulf %33, %37 : vector<8x64xf32>
    %39 = vector.broadcast %3 : vector<1x64xf32> to vector<8x64xf32>
    %40 = arith.addf %38, %39 : vector<8x64xf32>
    %c0_11 = arith.constant 0 : index
    %c0_12 = arith.constant 0 : index
    %41 = vector.load %arg2[%c0_11, %c0_12] : memref<64x64xf32, #tpu.memory_space<vmem>>, vector<64x64xf32>
    %cst_13 = arith.constant dense<0.000000e+00> : vector<8x64xf32>
    %42 = tpu.matmul %40, %41, %cst_13 {dimension_numbers = #tpu.dot_dimension_numbers<[1], [0], [0], [1], [0, 0, 1, 1], [], []>} : vector<8x64xf32>, vector<64x64xf32>, vector<8x64xf32> -> vector<8x64xf32>
    %43 = vector.broadcast %4 : vector<1x64xf32> to vector<8x64xf32>
    %44 = arith.addf %42, %43 : vector<8x64xf32>
    %cst_14 = arith.constant 0.000000e+00 : f32
    %45 = vector.broadcast %cst_14 : f32 to vector<8x64xf32>
    %46 = arith.maximumf %44, %45 : vector<8x64xf32>
    %cst_15 = arith.constant dense<0.000000e+00> : vector<64xf32>
    %47 = vector.multi_reduction <add>, %46, %cst_15 [0] : vector<8x64xf32> to vector<64xf32>
    %48 = vector.shape_cast %47 : vector<64xf32> to vector<1x64xf32>
    %cst_16 = arith.constant 8.000000e+00 : f32
    %49 = vector.broadcast %cst_16 : f32 to vector<1x64xf32>
    %50 = arith.divf %48, %49 : vector<1x64xf32>
    %51 = vector.broadcast %50 : vector<1x64xf32> to vector<8x64xf32>
    %52 = arith.subf %46, %51 : vector<8x64xf32>
    %53 = vector.broadcast %50 : vector<1x64xf32> to vector<8x64xf32>
    %54 = arith.subf %46, %53 : vector<8x64xf32>
    %55 = arith.mulf %52, %54 : vector<8x64xf32>
    %cst_17 = arith.constant dense<0.000000e+00> : vector<64xf32>
    %56 = vector.multi_reduction <add>, %55, %cst_17 [0] : vector<8x64xf32> to vector<64xf32>
    %57 = vector.shape_cast %56 : vector<64xf32> to vector<1x64xf32>
    %cst_18 = arith.constant 8.000000e+00 : f32
    %58 = vector.broadcast %cst_18 : f32 to vector<1x64xf32>
    %59 = arith.divf %57, %58 : vector<1x64xf32>
    %60 = vector.broadcast %50 : vector<1x64xf32> to vector<8x64xf32>
    %61 = arith.subf %46, %60 : vector<8x64xf32>
    %62 = vector.broadcast %5 : vector<1x64xf32> to vector<8x64xf32>
    %63 = arith.mulf %62, %61 : vector<8x64xf32>
    %cst_19 = arith.constant 9.99999974E-6 : f32
    %64 = vector.broadcast %cst_19 : f32 to vector<1x64xf32>
    %65 = arith.addf %59, %64 : vector<1x64xf32>
    %66 = math.rsqrt %65 : vector<1x64xf32>
    %67 = vector.broadcast %66 : vector<1x64xf32> to vector<8x64xf32>
    %68 = arith.mulf %63, %67 : vector<8x64xf32>
    %69 = vector.broadcast %6 : vector<1x64xf32> to vector<8x64xf32>
    %70 = arith.addf %68, %69 : vector<8x64xf32>
    %71 = vector.broadcast %7 : vector<1x64xf32> to vector<8x64xf32>
    %72 = arith.mulf %70, %71 : vector<8x64xf32>
    %cst_20 = arith.constant dense<0.000000e+00> : vector<8xf32>
    %73 = vector.multi_reduction <add>, %72, %cst_20 [1] : vector<8x64xf32> to vector<8xf32>
    %74 = vector.shape_cast %73 : vector<8xf32> to vector<8x1xf32>
    %75 = vector.broadcast %8 : vector<1x1xf32> to vector<8x1xf32>
    %76 = arith.addf %74, %75 : vector<8x1xf32>
    %c0_21 = arith.constant 0 : index
    %c0_22 = arith.constant 0 : index
    %77 = vector.load %arg4[%c0_21, %c0_22] : memref<8x1xf32, #tpu.memory_space<vmem>>, vector<8x1xf32>
    tpu.vector_store %arg4[%c0_21, %c0_22], %76 {strides = array<i32>} : memref<8x1xf32, #tpu.memory_space<vmem>>, vector<8x1xf32>,
    return
  }
}

</mosaic_0001>

<llo_original>
// kernel: value_network_forward.1
$region0: #{value_network_forward.1}
  #allocation0 [shape = 'u32[]', space=smem, size = 0x4, offset = 0x4, fixed_abs, tag = 'smem constant byte address 0x4 - core index']
  #allocation1 [shape = 'u32[72,128]{1,0:T(1,128)}', space=vmem, size = 0x9000, scoped, tag = 'internal scratch']
  %s0 = inlined_call_operand.vmem [shape: f32[8,3023], index: 0, kind: input, shape index: {}]
  %s1 = inlined_call_operand.vmem [shape: bf16[3023,64], index: 1, kind: input, shape index: {}]
  %s2 = inlined_call_operand.vmem [shape: f32[64,64], index: 2, kind: input, shape index: {}]
  %s3 = inlined_call_operand.vmem [shape: f32[8,64], index: 3, kind: input, shape index: {}]
  %s4 = inlined_call_operand.vmem [shape: f32[8,1], index: 4, kind: output, shape index: {}]
  %s5 = sld [smem:[#allocation0]]
  $region26: #{value_network_forward.1} parent=0
    _
  %s7 = ssub.s32 1, %s5
  %s8 = scalar_select 0, %s7, %s5
  // Predicated region
  $region2: #{value_network_forward.1} parent=0 // pred_check
    _
  $region3: #{value_network_forward.1} parent=0 // pred_check_branch
    %10 = sbr.rel (0) target = $region5
  $region4: #{value_network_forward.1} parent=0 // pred_region
    _
  $region5: #{value_network_forward.1} parent=0 // pred_fallthru
    _
  // Predicated region
  $region6: #{value_network_forward.1} parent=0 // pred_check
    _
  $region7: #{value_network_forward.1} parent=0 // pred_check_branch
    %12 = sbr.rel (0) target = $region9
  $region8: #{value_network_forward.1} parent=0 // pred_region
    _
  $region9: #{value_network_forward.1} parent=0 // pred_fallthru
    _
  // Predicated region
  $region10: #{value_network_forward.1} parent=0 // pred_check
    _
  $region11: #{value_network_forward.1} parent=0 // pred_check_branch
    %14 = sbr.rel (0) target = $region13
  $region12: #{value_network_forward.1} parent=0 // pred_region
    _
  $region13: #{value_network_forward.1} parent=0 // pred_fallthru
    _
  // Predicated region
  $region14: #{value_network_forward.1} parent=0 // pred_check
    _
  $region15: #{value_network_forward.1} parent=0 // pred_check_branch
    %16 = sbr.rel (0) target = $region17
  $region16: #{value_network_forward.1} parent=0 // pred_region
    _
  $region17: #{value_network_forward.1} parent=0 // pred_fallthru
    _
  %v18 = vld [vmem:[%s3] sm:$0xff]
  %v19 = vld [vmem:[%s0] sm:$0xff]
  %v20 = vld [vmem:[%s0 + $0x8] sm:$0xff]
  %v21 = vld [vmem:[%s0 + $0x10] sm:$0xff]
  %v22 = vld [vmem:[%s0 + $0x18] sm:$0xff]
  %v23 = vld [vmem:[%s0 + $0x20] sm:$0xff]
  %v24 = vld [vmem:[%s0 + $0x28] sm:$0xff]
  %v25 = vld [vmem:[%s0 + $0x30] sm:$0xff]
  %v26 = vld [vmem:[%s0 + $0x38] sm:$0xff]
  %v27 = vld [vmem:[%s0 + $0x40] sm:$0xff]
  %v28 = vld [vmem:[%s0 + $0x48] sm:$0xff]
  %v29 = vld [vmem:[%s0 + $0x50] sm:$0xff]
  %v30 = vld [vmem:[%s0 + $0x58] sm:$0xff]
  %v31 = vld [vmem:[%s0 + $0x60] sm:$0xff]
  %v32 = vld [vmem:[%s0 + $0x68] sm:$0xff]
  %v33 = vld [vmem:[%s0 + $0x70] sm:$0xff]
  %v34 = vld [vmem:[%s0 + $0x78] sm:$0xff]
  %v35 = vld [vmem:[%s0 + $0x80] sm:$0xff]
  %v36 = vld [vmem:[%s0 + $0x88] sm:$0xff]
  %v37 = vld [vmem:[%s0 + $0x90] sm:$0xff]
  %v38 = vld [vmem:[%s0 + $0x98] sm:$0xff]
  %v39 = vld [vmem:[%s0 + $0xa0] sm:$0xff]
  %v40 = vld [vmem:[%s0 + $0xa8] sm:$0xff]
  %v41 = vld [vmem:[%s0 + $0xb0] sm:$0xff]
  %v42 = vld [vmem:[%s0 + $0xb8] sm:$0xff]
  %v43 = vpack.c.bf16 %v19, %v19
  %v44 = vpack.c.bf16 %v20, %v20
  %v45 = vpack.c.bf16 %v21, %v21
  %v46 = vpack.c.bf16 %v22, %v22
  %v47 = vpack.c.bf16 %v23, %v23
  %v48 = vpack.c.bf16 %v24, %v24
  %v49 = vpack.c.bf16 %v25, %v25
  %v50 = vpack.c.bf16 %v26, %v26
  %v51 = vpack.c.bf16 %v27, %v27
  %v52 = vpack.c.bf16 %v28, %v28
  %v53 = vpack.c.bf16 %v29, %v29
  %v54 = vpack.c.bf16 %v30, %v30
  %v55 = vpack.c.bf16 %v31, %v31
  %v56 = vpack.c.bf16 %v32, %v32
  %v57 = vpack.c.bf16 %v33, %v33
  %v58 = vpack.c.bf16 %v34, %v34
  %v59 = vpack.c.bf16 %v35, %v35
  %v60 = vpack.c.bf16 %v36, %v36
  %v61 = vpack.c.bf16 %v37, %v37
  %v62 = vpack.c.bf16 %v38, %v38
  %v63 = vpack.c.bf16 %v39, %v39
  %v64 = vpack.c.bf16 %v40, %v40
  %v65 = vpack.c.bf16 %v41, %v41
  %v66 = vpack.c.bf16 %v42, %v42
  %v67 = vld [vmem:[%s1] sm:$0xf]
  %v68 = vld [vmem:[%s1 + $0x4] sm:$0xf]
  %v69 = vld [vmem:[%s1 + $0x8] sm:$0xf]
  %v70 = vld [vmem:[%s1 + $0xc] sm:$0xf]
  %v71 = vld [vmem:[%s1 + $0x10] sm:$0xf]
  %v72 = vld [vmem:[%s1 + $0x14] sm:$0xf]
  %v73 = vld [vmem:[%s1 + $0x18] sm:$0xf]
  %v74 = vld [vmem:[%s1 + $0x1c] sm:$0xf]
  %v75 = vld [vmem:[%s1 + $0x20] sm:$0xf]
  %v76 = vld [vmem:[%s1 + $0x24] sm:$0xf]
  %v77 = vld [vmem:[%s1 + $0x28] sm:$0xf]
  %v78 = vld [vmem:[%s1 + $0x2c] sm:$0xf]
  %v79 = vld [vmem:[%s1 + $0x30] sm:$0xf]
  %v80 = vld [vmem:[%s1 + $0x34] sm:$0xf]
  %v81 = vld [vmem:[%s1 + $0x38] sm:$0xf]
  %v82 = vld [vmem:[%s1 + $0x3c] sm:$0xf]
  %v83 = vld [vmem:[%s1 + $0x40] sm:$0xf]
  %v84 = vld [vmem:[%s1 + $0x44] sm:$0xf]
  %v85 = vld [vmem:[%s1 + $0x48] sm:$0xf]
  %v86 = vld [vmem:[%s1 + $0x4c] sm:$0xf]
  %v87 = vld [vmem:[%s1 + $0x50] sm:$0xf]
  %v88 = vld [vmem:[%s1 + $0x54] sm:$0xf]
  %v89 = vld [vmem:[%s1 + $0x58] sm:$0xf]
  %v90 = vld [vmem:[%s1 + $0x5c] sm:$0xf]
  %v91 = vld [vmem:[%s1 + $0x60] sm:$0xf]
  %v92 = vld [vmem:[%s1 + $0x64] sm:$0xf]
  %v93 = vld [vmem:[%s1 + $0x68] sm:$0xf]
  %v94 = vld [vmem:[%s1 + $0x6c] sm:$0xf]
  %v95 = vld [vmem:[%s1 + $0x70] sm:$0xf]
  %v96 = vld [vmem:[%s1 + $0x74] sm:$0xf]
  %v97 = vld [vmem:[%s1 + $0x78] sm:$0xf]
  %v98 = vld [vmem:[%s1 + $0x7c] sm:$0xf]
  %v99 = vld [vmem:[%s1 + $0x80] sm:$0xf]
  %v100 = vld [vmem:[%s1 + $0x84] sm:$0xf]
  %v101 = vld [vmem:[%s1 + $0x88] sm:$0xf]
  %v102 = vld [vmem:[%s1 + $0x8c] sm:$0xf]
  %v103 = vld [vmem:[%s1 + $0x90] sm:$0xf]
  %v104 = vld [vmem:[%s1 + $0x94] sm:$0xf]
  %v105 = vld [vmem:[%s1 + $0x98] sm:$0xf]
  %v106 = vld [vmem:[%s1 + $0x9c] sm:$0xf]
  %v107 = vld [vmem:[%s1 + $0xa0] sm:$0xf]
  %v108 = vld [vmem:[%s1 + $0xa4] sm:$0xf]
  %v109 = vld [vmem:[%s1 + $0xa8] sm:$0xf]
  %v110 = vld [vmem:[%s1 + $0xac] sm:$0xf]
  %v111 = vld [vmem:[%s1 + $0xb0] sm:$0xf]
  %v112 = vld [vmem:[%s1 + $0xb4] sm:$0xf]
  %v113 = vld [vmem:[%s1 + $0xb8] sm:$0xf]
  %v114 = vld [vmem:[%s1 + $0xbc] sm:$0xf]
  %v115 = vld [vmem:[%s1 + $0xc0] sm:$0xf]
  %v116 = vld [vmem:[%s1 + $0xc4] sm:$0xf]
  %v117 = vld [vmem:[%s1 + $0xc8] sm:$0xf]
  %v118 = vld [vmem:[%s1 + $0xcc] sm:$0xf]
  %v119 = vld [vmem:[%s1 + $0xd0] sm:$0xf]
  %v120 = vld [vmem:[%s1 + $0xd4] sm:$0xf]
  %v121 = vld [vmem:[%s1 + $0xd8] sm:$0xf]
  %v122 = vld [vmem:[%s1 + $0xdc] sm:$0xf]
  %v123 = vld [vmem:[%s1 + $0xe0] sm:$0xf]
  %v124 = vld [vmem:[%s1 + $0xe4] sm:$0xf]
  %v125 = vld [vmem:[%s1 + $0xe8] sm:$0xf]
  %v126 = vld [vmem:[%s1 + $0xec] sm:$0xf]
  %v127 = vld [vmem:[%s1 + $0xf0] sm:$0xf]
  %v128 = vld [vmem:[%s1 + $0xf4] sm:$0xf]
  %v129 = vld [vmem:[%s1 + $0xf8] sm:$0xf]
  %v130 = vld [vmem:[%s1 + $0xfc] sm:$0xf]
  %v131 = vld [vmem:[%s1 + $0x100] sm:$0xf]
  %v132 = vld [vmem:[%s1 + $0x104] sm:$0xf]
  %v133 = vld [vmem:[%s1 + $0x108] sm:$0xf]
  %v134 = vld [vmem:[%s1 + $0x10c] sm:$0xf]
  %v135 = vld [vmem:[%s1 + $0x110] sm:$0xf]
  %v136 = vld [vmem:[%s1 + $0x114] sm:$0xf]
  %v137 = vld [vmem:[%s1 + $0x118] sm:$0xf]
  %v138 = vld [vmem:[%s1 + $0x11c] sm:$0xf]
  %v139 = vld [vmem:[%s1 + $0x120] sm:$0xf]
  %v140 = vld [vmem:[%s1 + $0x124] sm:$0xf]
  %v141 = vld [vmem:[%s1 + $0x128] sm:$0xf]
  %v142 = vld [vmem:[%s1 + $0x12c] sm:$0xf]
  %v143 = vld [vmem:[%s1 + $0x130] sm:$0xf]
  %v144 = vld [vmem:[%s1 + $0x134] sm:$0xf]
  %v145 = vld [vmem:[%s1 + $0x138] sm:$0xf]
  %v146 = vld [vmem:[%s1 + $0x13c] sm:$0xf]
  %v147 = vld [vmem:[%s1 + $0x140] sm:$0xf]
  %v148 = vld [vmem:[%s1 + $0x144] sm:$0xf]
  %v149 = vld [vmem:[%s1 + $0x148] sm:$0xf]
  %v150 = vld [vmem:[%s1 + $0x14c] sm:$0xf]
  %v151 = vld [vmem:[%s1 + $0x150] sm:$0xf]
  %v152 = vld [vmem:[%s1 + $0x154] sm:$0xf]
  %v153 = vld [vmem:[%s1 + $0x158] sm:$0xf]
  %v154 = vld [vmem:[%s1 + $0x15c] sm:$0xf]
  %v155 = vld [vmem:[%s1 + $0x160] sm:$0xf]
  %v156 = vld [vmem:[%s1 + $0x164] sm:$0xf]
  %v157 = vld [vmem:[%s1 + $0x168] sm:$0xf]
  %v158 = vld [vmem:[%s1 + $0x16c] sm:$0xf]
  %v159 = vld [vmem:[%s1 + $0x170] sm:$0xf]
  %v160 = vld [vmem:[%s1 + $0x174] sm:$0xf]
  %v161 = vld [vmem:[%s1 + $0x178] sm:$0xf]
  %v162 = vld [vmem:[%s1 + $0x17c] sm:$0xf]
  %v163 = vld [vmem:[%s1 + $0x180] sm:$0xf]
  %v164 = vld [vmem:[%s1 + $0x184] sm:$0xf]
  %v165 = vld [vmem:[%s1 + $0x188] sm:$0xf]
  %v166 = vld [vmem:[%s1 + $0x18c] sm:$0xf]
  %v167 = vld [vmem:[%s1 + $0x190] sm:$0xf]
  %v168 = vld [vmem:[%s1 + $0x194] sm:$0xf]
  %v169 = vld [vmem:[%s1 + $0x198] sm:$0xf]
  %v170 = vld [vmem:[%s1 + $0x19c] sm:$0xf]
  %v171 = vld [vmem:[%s1 + $0x1a0] sm:$0xf]
  %v172 = vld [vmem:[%s1 + $0x1a4] sm:$0xf]
  %v173 = vld [vmem:[%s1 + $0x1a8] sm:$0xf]
  %v174 = vld [vmem:[%s1 + $0x1ac] sm:$0xf]
  %v175 = vld [vmem:[%s1 + $0x1b0] sm:$0xf]
  %v176 = vld [vmem:[%s1 + $0x1b4] sm:$0xf]
  %v177 = vld [vmem:[%s1 + $0x1b8] sm:$0xf]
  %v178 = vld [vmem:[%s1 + $0x1bc] sm:$0xf]
  %v179 = vld [vmem:[%s1 + $0x1c0] sm:$0xf]
  %v180 = vld [vmem:[%s1 + $0x1c4] sm:$0xf]
  %v181 = vld [vmem:[%s1 + $0x1c8] sm:$0xf]
  %v182 = vld [vmem:[%s1 + $0x1cc] sm:$0xf]
  %v183 = vld [vmem:[%s1 + $0x1d0] sm:$0xf]
  %v184 = vld [vmem:[%s1 + $0x1d4] sm:$0xf]
  %v185 = vld [vmem:[%s1 + $0x1d8] sm:$0xf]
  %v186 = vld [vmem:[%s1 + $0x1dc] sm:$0xf]
  %v187 = vld [vmem:[%s1 + $0x1e0] sm:$0xf]
  %v188 = vld [vmem:[%s1 + $0x1e4] sm:$0xf]
  %v189 = vld [vmem:[%s1 + $0x1e8] sm:$0xf]
  %v190 = vld [vmem:[%s1 + $0x1ec] sm:$0xf]
  %v191 = vld [vmem:[%s1 + $0x1f0] sm:$0xf]
  %v192 = vld [vmem:[%s1 + $0x1f4] sm:$0xf]
  %v193 = vld [vmem:[%s1 + $0x1f8] sm:$0xf]
  %v194 = vld [vmem:[%s1 + $0x1fc] sm:$0xf]
  %v195 = vld [vmem:[%s1 + $0x200] sm:$0xf]
  %v196 = vld [vmem:[%s1 + $0x204] sm:$0xf]
  %v197 = vld [vmem:[%s1 + $0x208] sm:$0xf]
  %v198 = vld [vmem:[%s1 + $0x20c] sm:$0xf]
  %v199 = vld [vmem:[%s1 + $0x210] sm:$0xf]
  %v200 = vld [vmem:[%s1 + $0x214] sm:$0xf]
  %v201 = vld [vmem:[%s1 + $0x218] sm:$0xf]
  %v202 = vld [vmem:[%s1 + $0x21c] sm:$0xf]
  %v203 = vld [vmem:[%s1 + $0x220] sm:$0xf]
  %v204 = vld [vmem:[%s1 + $0x224] sm:$0xf]
  %v205 = vld [vmem:[%s1 + $0x228] sm:$0xf]
  %v206 = vld [vmem:[%s1 + $0x22c] sm:$0xf]
  %v207 = vld [vmem:[%s1 + $0x230] sm:$0xf]
  %v208 = vld [vmem:[%s1 + $0x234] sm:$0xf]
  %v209 = vld [vmem:[%s1 + $0x238] sm:$0xf]
  %v210 = vld [vmem:[%s1 + $0x23c] sm:$0xf]
  %v211 = vld [vmem:[%s1 + $0x240] sm:$0xf]
  %v212 = vld [vmem:[%s1 + $0x244] sm:$0xf]
  %v213 = vld [vmem:[%s1 + $0x248] sm:$0xf]
  %v214 = vld [vmem:[%s1 + $0x24c] sm:$0xf]
  %v215 = vld [vmem:[%s1 + $0x250] sm:$0xf]
  %v216 = vld [vmem:[%s1 + $0x254] sm:$0xf]
  %v217 = vld [vmem:[%s1 + $0x258] sm:$0xf]
  %v218 = vld [vmem:[%s1 + $0x25c] sm:$0xf]
  %v219 = vld [vmem:[%s1 + $0x260] sm:$0xf]
  %v220 = vld [vmem:[%s1 + $0x264] sm:$0xf]
  %v221 = vld [vmem:[%s1 + $0x268] sm:$0xf]
  %v222 = vld [vmem:[%s1 + $0x26c] sm:$0xf]
  %v223 = vld [vmem:[%s1 + $0x270] sm:$0xf]
  %v224 = vld [vmem:[%s1 + $0x274] sm:$0xf]
  %v225 = vld [vmem:[%s1 + $0x278] sm:$0xf]
  %v226 = vld [vmem:[%s1 + $0x27c] sm:$0xf]
  %v227 = vld [vmem:[%s1 + $0x280] sm:$0xf]
  %v228 = vld [vmem:[%s1 + $0x284] sm:$0xf]
  %v229 = vld [vmem:[%s1 + $0x288] sm:$0xf]
  %v230 = vld [vmem:[%s1 + $0x28c] sm:$0xf]
  %v231 = vld [vmem:[%s1 + $0x290] sm:$0xf]
  %v232 = vld [vmem:[%s1 + $0x294] sm:$0xf]
  %v233 = vld [vmem:[%s1 + $0x298] sm:$0xf]
  %v234 = vld [vmem:[%s1 + $0x29c] sm:$0xf]
  %v235 = vld [vmem:[%s1 + $0x2a0] sm:$0xf]
  %v236 = vld [vmem:[%s1 + $0x2a4] sm:$0xf]
  %v237 = vld [vmem:[%s1 + $0x2a8] sm:$0xf]
  %v238 = vld [vmem:[%s1 + $0x2ac] sm:$0xf]
  %v239 = vld [vmem:[%s1 + $0x2b0] sm:$0xf]
  %v240 = vld [vmem:[%s1 + $0x2b4] sm:$0xf]
  %v241 = vld [vmem:[%s1 + $0x2b8] sm:$0xf]
  %v242 = vld [vmem:[%s1 + $0x2bc] sm:$0xf]
  %v243 = vld [vmem:[%s1 + $0x2c0] sm:$0xf]
  %v244 = vld [vmem:[%s1 + $0x2c4] sm:$0xf]
  %v245 = vld [vmem:[%s1 + $0x2c8] sm:$0xf]
  %v246 = vld [vmem:[%s1 + $0x2cc] sm:$0xf]
  %v247 = vld [vmem:[%s1 + $0x2d0] sm:$0xf]
  %v248 = vld [vmem:[%s1 + $0x2d4] sm:$0xf]
  %v249 = vld [vmem:[%s1 + $0x2d8] sm:$0xf]
  %v250 = vld [vmem:[%s1 + $0x2dc] sm:$0xf]
  %v251 = vld [vmem:[%s1 + $0x2e0] sm:$0xf]
  %v252 = vld [vmem:[%s1 + $0x2e4] sm:$0xf]
  %v253 = vld [vmem:[%s1 + $0x2e8] sm:$0xf]
  %v254 = vld [vmem:[%s1 + $0x2ec] sm:$0xf]
  %v255 = vld [vmem:[%s1 + $0x2f0] sm:$0xf]
  %v256 = vld [vmem:[%s1 + $0x2f4] sm:$0xf]
  %v257 = vld [vmem:[%s1 + $0x2f8] sm:$0xf]
  %v258 = vld [vmem:[%s1 + $0x2fc] sm:$0xf]
  %v259 = vld [vmem:[%s1 + $0x300] sm:$0xf]
  %v260 = vld [vmem:[%s1 + $0x304] sm:$0xf]
  %v261 = vld [vmem:[%s1 + $0x308] sm:$0xf]
  %v262 = vld [vmem:[%s1 + $0x30c] sm:$0xf]
  %v263 = vld [vmem:[%s1 + $0x310] sm:$0xf]
  %v264 = vld [vmem:[%s1 + $0x314] sm:$0xf]
  %v265 = vld [vmem:[%s1 + $0x318] sm:$0xf]
  %v266 = vld [vmem:[%s1 + $0x31c] sm:$0xf]
  %v267 = vld [vmem:[%s1 + $0x320] sm:$0xf]
  %v268 = vld [vmem:[%s1 + $0x324] sm:$0xf]
  %v269 = vld [vmem:[%s1 + $0x328] sm:$0xf]
  %v270 = vld [vmem:[%s1 + $0x32c] sm:$0xf]
  %v271 = vld [vmem:[%s1 + $0x330] sm:$0xf]
  %v272 = vld [vmem:[%s1 + $0x334] sm:$0xf]
  %v273 = vld [vmem:[%s1 + $0x338] sm:$0xf]
  %v274 = vld [vmem:[%s1 + $0x33c] sm:$0xf]
  %v275 = vld [vmem:[%s1 + $0x340] sm:$0xf]
  %v276 = vld [vmem:[%s1 + $0x344] sm:$0xf]
  %v277 = vld [vmem:[%s1 + $0x348] sm:$0xf]
  %v278 = vld [vmem:[%s1 + $0x34c] sm:$0xf]
  %v279 = vld [vmem:[%s1 + $0x350] sm:$0xf]
  %v280 = vld [vmem:[%s1 + $0x354] sm:$0xf]
  %v281 = vld [vmem:[%s1 + $0x358] sm:$0xf]
  %v282 = vld [vmem:[%s1 + $0x35c] sm:$0xf]
  %v283 = vld [vmem:[%s1 + $0x360] sm:$0xf]
  %v284 = vld [vmem:[%s1 + $0x364] sm:$0xf]
  %v285 = vld [vmem:[%s1 + $0x368] sm:$0xf]
  %v286 = vld [vmem:[%s1 + $0x36c] sm:$0xf]
  %v287 = vld [vmem:[%s1 + $0x370] sm:$0xf]
  %v288 = vld [vmem:[%s1 + $0x374] sm:$0xf]
  %v289 = vld [vmem:[%s1 + $0x378] sm:$0xf]
  %v290 = vld [vmem:[%s1 + $0x37c] sm:$0xf]
  %v291 = vld [vmem:[%s1 + $0x380] sm:$0xf]
  %v292 = vld [vmem:[%s1 + $0x384] sm:$0xf]
  %v293 = vld [vmem:[%s1 + $0x388] sm:$0xf]
  %v294 = vld [vmem:[%s1 + $0x38c] sm:$0xf]
  %v295 = vld [vmem:[%s1 + $0x390] sm:$0xf]
  %v296 = vld [vmem:[%s1 + $0x394] sm:$0xf]
  %v297 = vld [vmem:[%s1 + $0x398] sm:$0xf]
  %v298 = vld [vmem:[%s1 + $0x39c] sm:$0xf]
  %v299 = vld [vmem:[%s1 + $0x3a0] sm:$0xf]
  %v300 = vld [vmem:[%s1 + $0x3a4] sm:$0xf]
  %v301 = vld [vmem:[%s1 + $0x3a8] sm:$0xf]
  %v302 = vld [vmem:[%s1 + $0x3ac] sm:$0xf]
  %v303 = vld [vmem:[%s1 + $0x3b0] sm:$0xf]
  %v304 = vld [vmem:[%s1 + $0x3b4] sm:$0xf]
  %v305 = vld [vmem:[%s1 + $0x3b8] sm:$0xf]
  %v306 = vld [vmem:[%s1 + $0x3bc] sm:$0xf]
  %v307 = vld [vmem:[%s1 + $0x3c0] sm:$0xf]
  %v308 = vld [vmem:[%s1 + $0x3c4] sm:$0xf]
  %v309 = vld [vmem:[%s1 + $0x3c8] sm:$0xf]
  %v310 = vld [vmem:[%s1 + $0x3cc] sm:$0xf]
  %v311 = vld [vmem:[%s1 + $0x3d0] sm:$0xf]
  %v312 = vld [vmem:[%s1 + $0x3d4] sm:$0xf]
  %v313 = vld [vmem:[%s1 + $0x3d8] sm:$0xf]
  %v314 = vld [vmem:[%s1 + $0x3dc] sm:$0xf]
  %v315 = vld [vmem:[%s1 + $0x3e0] sm:$0xf]
  %v316 = vld [vmem:[%s1 + $0x3e4] sm:$0xf]
  %v317 = vld [vmem:[%s1 + $0x3e8] sm:$0xf]
  %v318 = vld [vmem:[%s1 + $0x3ec] sm:$0xf]
  %v319 = vld [vmem:[%s1 + $0x3f0] sm:$0xf]
  %v320 = vld [vmem:[%s1 + $0x3f4] sm:$0xf]
  %v321 = vld [vmem:[%s1 + $0x3f8] sm:$0xf]
  %v322 = vld [vmem:[%s1 + $0x3fc] sm:$0xf]
  %v323 = vld [vmem:[%s1 + $0x400] sm:$0xf]
  %v324 = vld [vmem:[%s1 + $0x404] sm:$0xf]
  %v325 = vld [vmem:[%s1 + $0x408] sm:$0xf]
  %v326 = vld [vmem:[%s1 + $0x40c] sm:$0xf]
  %v327 = vld [vmem:[%s1 + $0x410] sm:$0xf]
  %v328 = vld [vmem:[%s1 + $0x414] sm:$0xf]
  %v329 = vld [vmem:[%s1 + $0x418] sm:$0xf]
  %v330 = vld [vmem:[%s1 + $0x41c] sm:$0xf]
  %v331 = vld [vmem:[%s1 + $0x420] sm:$0xf]
  %v332 = vld [vmem:[%s1 + $0x424] sm:$0xf]
  %v333 = vld [vmem:[%s1 + $0x428] sm:$0xf]
  %v334 = vld [vmem:[%s1 + $0x42c] sm:$0xf]
  %v335 = vld [vmem:[%s1 + $0x430] sm:$0xf]
  %v336 = vld [vmem:[%s1 + $0x434] sm:$0xf]
  %v337 = vld [vmem:[%s1 + $0x438] sm:$0xf]
  %v338 = vld [vmem:[%s1 + $0x43c] sm:$0xf]
  %v339 = vld [vmem:[%s1 + $0x440] sm:$0xf]
  %v340 = vld [vmem:[%s1 + $0x444] sm:$0xf]
  %v341 = vld [vmem:[%s1 + $0x448] sm:$0xf]
  %v342 = vld [vmem:[%s1 + $0x44c] sm:$0xf]
  %v343 = vld [vmem:[%s1 + $0x450] sm:$0xf]
  %v344 = vld [vmem:[%s1 + $0x454] sm:$0xf]
  %v345 = vld [vmem:[%s1 + $0x458] sm:$0xf]
  %v346 = vld [vmem:[%s1 + $0x45c] sm:$0xf]
  %v347 = vld [vmem:[%s1 + $0x460] sm:$0xf]
  %v348 = vld [vmem:[%s1 + $0x464] sm:$0xf]
  %v349 = vld [vmem:[%s1 + $0x468] sm:$0xf]
  %v350 = vld [vmem:[%s1 + $0x46c] sm:$0xf]
  %v351 = vld [vmem:[%s1 + $0x470] sm:$0xf]
  %v352 = vld [vmem:[%s1 + $0x474] sm:$0xf]
  %v353 = vld [vmem:[%s1 + $0x478] sm:$0xf]
  %v354 = vld [vmem:[%s1 + $0x47c] sm:$0xf]
  %v355 = vld [vmem:[%s1 + $0x480] sm:$0xf]
  %v356 = vld [vmem:[%s1 + $0x484] sm:$0xf]
  %v357 = vld [vmem:[%s1 + $0x488] sm:$0xf]
  %v358 = vld [vmem:[%s1 + $0x48c] sm:$0xf]
  %v359 = vld [vmem:[%s1 + $0x490] sm:$0xf]
  %v360 = vld [vmem:[%s1 + $0x494] sm:$0xf]
  %v361 = vld [vmem:[%s1 + $0x498] sm:$0xf]
  %v362 = vld [vmem:[%s1 + $0x49c] sm:$0xf]
  %v363 = vld [vmem:[%s1 + $0x4a0] sm:$0xf]
  %v364 = vld [vmem:[%s1 + $0x4a4] sm:$0xf]
  %v365 = vld [vmem:[%s1 + $0x4a8] sm:$0xf]
  %v366 = vld [vmem:[%s1 + $0x4ac] sm:$0xf]
  %v367 = vld [vmem:[%s1 + $0x4b0] sm:$0xf]
  %v368 = vld [vmem:[%s1 + $0x4b4] sm:$0xf]
  %v369 = vld [vmem:[%s1 + $0x4b8] sm:$0xf]
  %v370 = vld [vmem:[%s1 + $0x4bc] sm:$0xf]
  %v371 = vld [vmem:[%s1 + $0x4c0] sm:$0xf]
  %v372 = vld [vmem:[%s1 + $0x4c4] sm:$0xf]
  %v373 = vld [vmem:[%s1 + $0x4c8] sm:$0xf]
  %v374 = vld [vmem:[%s1 + $0x4cc] sm:$0xf]
  %v375 = vld [vmem:[%s1 + $0x4d0] sm:$0xf]
  %v376 = vld [vmem:[%s1 + $0x4d4] sm:$0xf]
  %v377 = vld [vmem:[%s1 + $0x4d8] sm:$0xf]
  %v378 = vld [vmem:[%s1 + $0x4dc] sm:$0xf]
  %v379 = vld [vmem:[%s1 + $0x4e0] sm:$0xf]
  %v380 = vld [vmem:[%s1 + $0x4e4] sm:$0xf]
  %v381 = vld [vmem:[%s1 + $0x4e8] sm:$0xf]
  %v382 = vld [vmem:[%s1 + $0x4ec] sm:$0xf]
  %v383 = vld [vmem:[%s1 + $0x4f0] sm:$0xf]
  %v384 = vld [vmem:[%s1 + $0x4f4] sm:$0xf]
  %v385 = vld [vmem:[%s1 + $0x4f8] sm:$0xf]
  %v386 = vld [vmem:[%s1 + $0x4fc] sm:$0xf]
  %v387 = vld [vmem:[%s1 + $0x500] sm:$0xf]
  %v388 = vld [vmem:[%s1 + $0x504] sm:$0xf]
  %v389 = vld [vmem:[%s1 + $0x508] sm:$0xf]
  %v390 = vld [vmem:[%s1 + $0x50c] sm:$0xf]
  %v391 = vld [vmem:[%s1 + $0x510] sm:$0xf]
  %v392 = vld [vmem:[%s1 + $0x514] sm:$0xf]
  %v393 = vld [vmem:[%s1 + $0x518] sm:$0xf]
  %v394 = vld [vmem:[%s1 + $0x51c] sm:$0xf]
  %v395 = vld [vmem:[%s1 + $0x520] sm:$0xf]
  %v396 = vld [vmem:[%s1 + $0x524] sm:$0xf]
  %v397 = vld [vmem:[%s1 + $0x528] sm:$0xf]
  %v398 = vld [vmem:[%s1 + $0x52c] sm:$0xf]
  %v399 = vld [vmem:[%s1 + $0x530] sm:$0xf]
  %v400 = vld [vmem:[%s1 + $0x534] sm:$0xf]
  %v401 = vld [vmem:[%s1 + $0x538] sm:$0xf]
  %v402 = vld [vmem:[%s1 + $0x53c] sm:$0xf]
  %v403 = vld [vmem:[%s1 + $0x540] sm:$0xf]
  %v404 = vld [vmem:[%s1 + $0x544] sm:$0xf]
  %v405 = vld [vmem:[%s1 + $0x548] sm:$0xf]
  %v406 = vld [vmem:[%s1 + $0x54c] sm:$0xf]
  %v407 = vld [vmem:[%s1 + $0x550] sm:$0xf]
  %v408 = vld [vmem:[%s1 + $0x554] sm:$0xf]
  %v409 = vld [vmem:[%s1 + $0x558] sm:$0xf]
  %v410 = vld [vmem:[%s1 + $0x55c] sm:$0xf]
  %v411 = vld [vmem:[%s1 + $0x560] sm:$0xf]
  %v412 = vld [vmem:[%s1 + $0x564] sm:$0xf]
  %v413 = vld [vmem:[%s1 + $0x568] sm:$0xf]
  %v414 = vld [vmem:[%s1 + $0x56c] sm:$0xf]
  %v415 = vld [vmem:[%s1 + $0x570] sm:$0xf]
  %v416 = vld [vmem:[%s1 + $0x574] sm:$0xf]
  %v417 = vld [vmem:[%s1 + $0x578] sm:$0xf]
  %v418 = vld [vmem:[%s1 + $0x57c] sm:$0xf]
  %v419 = vld [vmem:[%s1 + $0x580] sm:$0xf]
  %v420 = vld [vmem:[%s1 + $0x584] sm:$0xf]
  %v421 = vld [vmem:[%s1 + $0x588] sm:$0xf]
  %v422 = vld [vmem:[%s1 + $0x58c] sm:$0xf]
  %v423 = vld [vmem:[%s1 + $0x590] sm:$0xf]
  %v424 = vld [vmem:[%s1 + $0x594] sm:$0xf]
  %v425 = vld [vmem:[%s1 + $0x598] sm:$0xf]
  %v426 = vld [vmem:[%s1 + $0x59c] sm:$0xf]
  %v427 = vld [vmem:[%s1 + $0x5a0] sm:$0xf]
  %v428 = vld [vmem:[%s1 + $0x5a4] sm:$0xf]
  %v429 = vld [vmem:[%s1 + $0x5a8] sm:$0xf]
  %v430 = vld [vmem:[%s1 + $0x5ac] sm:$0xf]
  %v431 = vld [vmem:[%s1 + $0x5b0] sm:$0xf]
  %v432 = vld [vmem:[%s1 + $0x5b4] sm:$0xf]
  %v433 = vld [vmem:[%s1 + $0x5b8] sm:$0xf]
  %v434 = vld [vmem:[%s1 + $0x5bc] sm:$0xf]
  %v435 = vld [vmem:[%s1 + $0x5c0] sm:$0xf]
  %v436 = vld [vmem:[%s1 + $0x5c4] sm:$0xf]
  %v437 = vld [vmem:[%s1 + $0x5c8] sm:$0xf]
  %v438 = vld [vmem:[%s1 + $0x5cc] sm:$0xf]
  %v439 = vld [vmem:[%s1 + $0x5d0] sm:$0xf]
  %v440 = vld [vmem:[%s1 + $0x5d4] sm:$0xf]
  %v441 = vld [vmem:[%s1 + $0x5d8] sm:$0xf]
  %v442 = vld [vmem:[%s1 + $0x5dc] sm:$0xf]
  %v443 = vld [vmem:[%s1 + $0x5e0] sm:$0xf]
  %v444 = vld [vmem:[%s1 + $0x5e4] sm:$0xf]
  %v445 = vperm.slane %v18, 0
  %v824 = vunpack.c.l.b16 %v67
  %v825 = vunpack.c.l.b16 %v68
  %v826 = vunpack.c.l.b16 %v69
  %v827 = vunpack.c.l.b16 %v70
  %v828 = vunpack.c.l.b16 %v71
  %v829 = vunpack.c.l.b16 %v72
  %v830 = vunpack.c.l.b16 %v73
  %v831 = vunpack.c.l.b16 %v74
  %v832 = vunpack.c.l.b16 %v75
  %v833 = vunpack.c.l.b16 %v76
  %v834 = vunpack.c.l.b16 %v77
  %v835 = vunpack.c.l.b16 %v78
  %v836 = vunpack.c.l.b16 %v79
  %v837 = vunpack.c.l.b16 %v80
  %v838 = vunpack.c.l.b16 %v81
  %v839 = vunpack.c.l.b16 %v82
  %v840 = vunpack.c.l.b16 %v83
  %v841 = vunpack.c.l.b16 %v84
  %v842 = vunpack.c.l.b16 %v85
  %v843 = vunpack.c.l.b16 %v86
  %v844 = vunpack.c.l.b16 %v87
  %v845 = vunpack.c.l.b16 %v88
  %v846 = vunpack.c.l.b16 %v89
  %v847 = vunpack.c.l.b16 %v90
  %v848 = vunpack.c.l.b16 %v91
  %v849 = vunpack.c.l.b16 %v92
  %v850 = vunpack.c.l.b16 %v93
  %v851 = vunpack.c.l.b16 %v94
  %v852 = vunpack.c.l.b16 %v95
  %v853 = vunpack.c.l.b16 %v96
  %v854 = vunpack.c.l.b16 %v97
  %v855 = vunpack.c.l.b16 %v98
  %v856 = vunpack.c.l.b16 %v99
  %v857 = vunpack.c.l.b16 %v100
  %v858 = vunpack.c.l.b16 %v101
  %v859 = vunpack.c.l.b16 %v102
  %v860 = vunpack.c.l.b16 %v103
  %v861 = vunpack.c.l.b16 %v104
  %v862 = vunpack.c.l.b16 %v105
  %v863 = vunpack.c.l.b16 %v106
  %v864 = vunpack.c.l.b16 %v107
  %v865 = vunpack.c.l.b16 %v108
  %v866 = vunpack.c.l.b16 %v109
  %v867 = vunpack.c.l.b16 %v110
  %v868 = vunpack.c.l.b16 %v111
  %v869 = vunpack.c.l.b16 %v112
  %v870 = vunpack.c.l.b16 %v113
  %v871 = vunpack.c.l.b16 %v114
  %v872 = vunpack.c.l.b16 %v115
  %v873 = vunpack.c.l.b16 %v116
  %v874 = vunpack.c.l.b16 %v117
  %v875 = vunpack.c.l.b16 %v118
  %v876 = vunpack.c.l.b16 %v119
  %v877 = vunpack.c.l.b16 %v120
  %v878 = vunpack.c.l.b16 %v121
  %v879 = vunpack.c.l.b16 %v122
  %v880 = vunpack.c.l.b16 %v123
  %v881 = vunpack.c.l.b16 %v124
  %v882 = vunpack.c.l.b16 %v125
  %v883 = vunpack.c.l.b16 %v126
  %v884 = vunpack.c.l.b16 %v127
  %v885 = vunpack.c.l.b16 %v128
  %v886 = vunpack.c.l.b16 %v129
  %v887 = vunpack.c.l.b16 %v130
  %v888 = vunpack.c.l.b16 %v131
  %v889 = vunpack.c.l.b16 %v132
  %v890 = vunpack.c.l.b16 %v133
  %v891 = vunpack.c.l.b16 %v134
  %v892 = vunpack.c.l.b16 %v135
  %v893 = vunpack.c.l.b16 %v136
  %v894 = vunpack.c.l.b16 %v137
  %v895 = vunpack.c.l.b16 %v138
  %v896 = vunpack.c.l.b16 %v139
  %v897 = vunpack.c.l.b16 %v140
  %v898 = vunpack.c.l.b16 %v141
  %v899 = vunpack.c.l.b16 %v142
  %v900 = vunpack.c.l.b16 %v143
  %v901 = vunpack.c.l.b16 %v144
  %v902 = vunpack.c.l.b16 %v145
  %v903 = vunpack.c.l.b16 %v146
  %v904 = vunpack.c.l.b16 %v147
  %v905 = vunpack.c.l.b16 %v148
  %v906 = vunpack.c.l.b16 %v149
  %v907 = vunpack.c.l.b16 %v150
  %v908 = vunpack.c.l.b16 %v151
  %v909 = vunpack.c.l.b16 %v152
  %v910 = vunpack.c.l.b16 %v153
  %v911 = vunpack.c.l.b16 %v154
  %v912 = vunpack.c.l.b16 %v155
  %v913 = vunpack.c.l.b16 %v156
  %v914 = vunpack.c.l.b16 %v157
  %v915 = vunpack.c.l.b16 %v158
  %v916 = vunpack.c.l.b16 %v159
  %v917 = vunpack.c.l.b16 %v160
  %v918 = vunpack.c.l.b16 %v161
  %v919 = vunpack.c.l.b16 %v162
  %v920 = vunpack.c.l.b16 %v163
  %v921 = vunpack.c.l.b16 %v164
  %v922 = vunpack.c.l.b16 %v165
  %v923 = vunpack.c.l.b16 %v166
  %v924 = vunpack.c.l.b16 %v167
  %v925 = vunpack.c.l.b16 %v168
  %v926 = vunpack.c.l.b16 %v169
  %v927 = vunpack.c.l.b16 %v170
  %v928 = vunpack.c.l.b16 %v171
  %v929 = vunpack.c.l.b16 %v172
  %v930 = vunpack.c.l.b16 %v173
  %v931 = vunpack.c.l.b16 %v174
  %v932 = vunpack.c.l.b16 %v175
  %v933 = vunpack.c.l.b16 %v176
  %v934 = vunpack.c.l.b16 %v177
  %v935 = vunpack.c.l.b16 %v178
  %v936 = vunpack.c.l.b16 %v179
  %v937 = vunpack.c.l.b16 %v180
  %v938 = vunpack.c.l.b16 %v181
  %v939 = vunpack.c.l.b16 %v182
  %v940 = vunpack.c.l.b16 %v183
  %v941 = vunpack.c.l.b16 %v184
  %v942 = vunpack.c.l.b16 %v185
  %v943 = vunpack.c.l.b16 %v186
  %v944 = vunpack.c.l.b16 %v187
  %v945 = vunpack.c.l.b16 %v188
  %v946 = vunpack.c.l.b16 %v189
  %v947 = vunpack.c.l.b16 %v190
  %v948 = vunpack.c.l.b16 %v191
  %v949 = vunpack.c.l.b16 %v192
  %v950 = vunpack.c.l.b16 %v193
  %v951 = vunpack.c.l.b16 %v194
  %v952 = vunpack.c.l.b16 %v195
  %v953 = vunpack.c.l.b16 %v196
  %v954 = vunpack.c.l.b16 %v197
  %v955 = vunpack.c.l.b16 %v198
  %v956 = vunpack.c.l.b16 %v199
  %v957 = vunpack.c.l.b16 %v200
  %v958 = vunpack.c.l.b16 %v201
  %v959 = vunpack.c.l.b16 %v202
  %v960 = vunpack.c.l.b16 %v203
  %v961 = vunpack.c.l.b16 %v204
  %v962 = vunpack.c.l.b16 %v205
  %v963 = vunpack.c.l.b16 %v206
  %v964 = vunpack.c.l.b16 %v207
  %v965 = vunpack.c.l.b16 %v208
  %v966 = vunpack.c.l.b16 %v209
  %v967 = vunpack.c.l.b16 %v210
  %v968 = vunpack.c.l.b16 %v211
  %v969 = vunpack.c.l.b16 %v212
  %v970 = vunpack.c.l.b16 %v213
  %v971 = vunpack.c.l.b16 %v214
  %v972 = vunpack.c.l.b16 %v215
  %v973 = vunpack.c.l.b16 %v216
  %v974 = vunpack.c.l.b16 %v217
  %v975 = vunpack.c.l.b16 %v218
  %v976 = vunpack.c.l.b16 %v219
  %v977 = vunpack.c.l.b16 %v220
  %v978 = vunpack.c.l.b16 %v221
  %v979 = vunpack.c.l.b16 %v222
  %v980 = vunpack.c.l.b16 %v223
  %v981 = vunpack.c.l.b16 %v224
  %v982 = vunpack.c.l.b16 %v225
  %v983 = vunpack.c.l.b16 %v226
  %v984 = vunpack.c.l.b16 %v227
  %v985 = vunpack.c.l.b16 %v228
  %v986 = vunpack.c.l.b16 %v229
  %v987 = vunpack.c.l.b16 %v230
  %v988 = vunpack.c.l.b16 %v231
  %v989 = vunpack.c.l.b16 %v232
  %v990 = vunpack.c.l.b16 %v233
  %v991 = vunpack.c.l.b16 %v234
  %v992 = vunpack.c.l.b16 %v235
  %v993 = vunpack.c.l.b16 %v236
  %v994 = vunpack.c.l.b16 %v237
  %v995 = vunpack.c.l.b16 %v238
  %v996 = vunpack.c.l.b16 %v239
  %v997 = vunpack.c.l.b16 %v240
  %v998 = vunpack.c.l.b16 %v241
  %v999 = vunpack.c.l.b16 %v242
  %v1000 = vunpack.c.l.b16 %v243
  %v1001 = vunpack.c.l.b16 %v244
  %v1002 = vunpack.c.l.b16 %v245
  %v1003 = vunpack.c.l.b16 %v246
  %v1004 = vunpack.c.l.b16 %v247
  %v1005 = vunpack.c.l.b16 %v248
  %v1006 = vunpack.c.l.b16 %v249
  %v1007 = vunpack.c.l.b16 %v250
  %v1008 = vunpack.c.l.b16 %v251
  %v1009 = vunpack.c.l.b16 %v252
  %v1010 = vunpack.c.l.b16 %v253
  %v1011 = vunpack.c.l.b16 %v254
  %v1012 = vunpack.c.l.b16 %v255
  %v1013 = vunpack.c.l.b16 %v256
  %v1014 = vunpack.c.l.b16 %v257
  %v1015 = vunpack.c.l.b16 %v258
  %v1016 = vunpack.c.l.b16 %v259
  %v1017 = vunpack.c.l.b16 %v260
  %v1018 = vunpack.c.l.b16 %v261
  %v1019 = vunpack.c.l.b16 %v262
  %v1020 = vunpack.c.l.b16 %v263
  %v1021 = vunpack.c.l.b16 %v264
  %v1022 = vunpack.c.l.b16 %v265
  %v1023 = vunpack.c.l.b16 %v266
  %v1024 = vunpack.c.l.b16 %v267
  %v1025 = vunpack.c.l.b16 %v268
  %v1026 = vunpack.c.l.b16 %v269
  %v1027 = vunpack.c.l.b16 %v270
  %v1028 = vunpack.c.l.b16 %v271
  %v1029 = vunpack.c.l.b16 %v272
  %v1030 = vunpack.c.l.b16 %v273
  %v1031 = vunpack.c.l.b16 %v274
  %v1032 = vunpack.c.l.b16 %v275
  %v1033 = vunpack.c.l.b16 %v276
  %v1034 = vunpack.c.l.b16 %v277
  %v1035 = vunpack.c.l.b16 %v278
  %v1036 = vunpack.c.l.b16 %v279
  %v1037 = vunpack.c.l.b16 %v280
  %v1038 = vunpack.c.l.b16 %v281
  %v1039 = vunpack.c.l.b16 %v282
  %v1040 = vunpack.c.l.b16 %v283
  %v1041 = vunpack.c.l.b16 %v284
  %v1042 = vunpack.c.l.b16 %v285
  %v1043 = vunpack.c.l.b16 %v286
  %v1044 = vunpack.c.l.b16 %v287
  %v1045 = vunpack.c.l.b16 %v288
  %v1046 = vunpack.c.l.b16 %v289
  %v1047 = vunpack.c.l.b16 %v290
  %v1048 = vunpack.c.l.b16 %v291
  %v1049 = vunpack.c.l.b16 %v292
  %v1050 = vunpack.c.l.b16 %v293
  %v1051 = vunpack.c.l.b16 %v294
  %v1052 = vunpack.c.l.b16 %v295
  %v1053 = vunpack.c.l.b16 %v296
  %v1054 = vunpack.c.l.b16 %v297
  %v1055 = vunpack.c.l.b16 %v298
  %v1056 = vunpack.c.l.b16 %v299
  %v1057 = vunpack.c.l.b16 %v300
  %v1058 = vunpack.c.l.b16 %v301
  %v1059 = vunpack.c.l.b16 %v302
  %v1060 = vunpack.c.l.b16 %v303
  %v1061 = vunpack.c.l.b16 %v304
  %v1062 = vunpack.c.l.b16 %v305
  %v1063 = vunpack.c.l.b16 %v306
  %v1064 = vunpack.c.l.b16 %v307
  %v1065 = vunpack.c.l.b16 %v308
  %v1066 = vunpack.c.l.b16 %v309
  %v1067 = vunpack.c.l.b16 %v310
  %v1068 = vunpack.c.l.b16 %v311
  %v1069 = vunpack.c.l.b16 %v312
  %v1070 = vunpack.c.l.b16 %v313
  %v1071 = vunpack.c.l.b16 %v314
  %v1072 = vunpack.c.l.b16 %v315
  %v1073 = vunpack.c.l.b16 %v316
  %v1074 = vunpack.c.l.b16 %v317
  %v1075 = vunpack.c.l.b16 %v318
  %v1076 = vunpack.c.l.b16 %v319
  %v1077 = vunpack.c.l.b16 %v320
  %v1078 = vunpack.c.l.b16 %v321
  %v1079 = vunpack.c.l.b16 %v322
  %v1080 = vunpack.c.l.b16 %v323
  %v1081 = vunpack.c.l.b16 %v324
  %v1082 = vunpack.c.l.b16 %v325
  %v1083 = vunpack.c.l.b16 %v326
  %v1084 = vunpack.c.l.b16 %v327
  %v1085 = vunpack.c.l.b16 %v328
  %v1086 = vunpack.c.l.b16 %v329
  %v1087 = vunpack.c.l.b16 %v330
  %v1088 = vunpack.c.l.b16 %v331
  %v1089 = vunpack.c.l.b16 %v332
  %v1090 = vunpack.c.l.b16 %v333
  %v1091 = vunpack.c.l.b16 %v334
  %v1092 = vunpack.c.l.b16 %v335
  %v1093 = vunpack.c.l.b16 %v336
  %v1094 = vunpack.c.l.b16 %v337
  %v1095 = vunpack.c.l.b16 %v338
  %v1096 = vunpack.c.l.b16 %v339
  %v1097 = vunpack.c.l.b16 %v340
  %v1098 = vunpack.c.l.b16 %v341
  %v1099 = vunpack.c.l.b16 %v342
  %v1100 = vunpack.c.l.b16 %v343
  %v1101 = vunpack.c.l.b16 %v344
  %v1102 = vunpack.c.l.b16 %v345
  %v1103 = vunpack.c.l.b16 %v346
  %v1104 = vunpack.c.l.b16 %v347
  %v1105 = vunpack.c.l.b16 %v348
  %v1106 = vunpack.c.l.b16 %v349
  %v1107 = vunpack.c.l.b16 %v350
  %v1108 = vunpack.c.l.b16 %v351
  %v1109 = vunpack.c.l.b16 %v352
  %v1110 = vunpack.c.l.b16 %v353
  %v1111 = vunpack.c.l.b16 %v354
  %v1112 = vunpack.c.l.b16 %v355
  %v1113 = vunpack.c.l.b16 %v356
  %v1114 = vunpack.c.l.b16 %v357
  %v1115 = vunpack.c.l.b16 %v358
  %v1116 = vunpack.c.l.b16 %v359
  %v1117 = vunpack.c.l.b16 %v360
  %v1118 = vunpack.c.l.b16 %v361
  %v1119 = vunpack.c.l.b16 %v362
  %v1120 = vunpack.c.l.b16 %v363
  %v1121 = vunpack.c.l.b16 %v364
  %v1122 = vunpack.c.l.b16 %v365
  %v1123 = vunpack.c.l.b16 %v366
  %v1124 = vunpack.c.l.b16 %v367
  %v1125 = vunpack.c.l.b16 %v368
  %v1126 = vunpack.c.l.b16 %v369
  %v1127 = vunpack.c.l.b16 %v370
  %v1128 = vunpack.c.l.b16 %v371
  %v1129 = vunpack.c.l.b16 %v372
  %v1130 = vunpack.c.l.b16 %v373
  %v1131 = vunpack.c.l.b16 %v374
  %v1132 = vunpack.c.l.b16 %v375
  %v1133 = vunpack.c.l.b16 %v376
  %v1134 = vunpack.c.l.b16 %v377
  %v1135 = vunpack.c.l.b16 %v378
  %v1136 = vunpack.c.l.b16 %v379
  %v1137 = vunpack.c.l.b16 %v380
  %v1138 = vunpack.c.l.b16 %v381
  %v1139 = vunpack.c.l.b16 %v382
  %v1140 = vunpack.c.l.b16 %v383
  %v1141 = vunpack.c.l.b16 %v384
  %v1142 = vunpack.c.l.b16 %v385
  %v1143 = vunpack.c.l.b16 %v386
  %v1144 = vunpack.c.l.b16 %v387
  %v1145 = vunpack.c.l.b16 %v388
  %v1146 = vunpack.c.l.b16 %v389
  %v1147 = vunpack.c.l.b16 %v390
  %v1148 = vunpack.c.l.b16 %v391
  %v1149 = vunpack.c.l.b16 %v392
  %v1150 = vunpack.c.l.b16 %v393
  %v1151 = vunpack.c.l.b16 %v394
  %v1152 = vunpack.c.l.b16 %v395
  %v1153 = vunpack.c.l.b16 %v396
  %v1154 = vunpack.c.l.b16 %v397
  %v1155 = vunpack.c.l.b16 %v398
  %v1156 = vunpack.c.l.b16 %v399
  %v1157 = vunpack.c.l.b16 %v400
  %v1158 = vunpack.c.l.b16 %v401
  %v1159 = vunpack.c.l.b16 %v402
  %v1160 = vunpack.c.l.b16 %v403
  %v1161 = vunpack.c.l.b16 %v404
  %v1162 = vunpack.c.l.b16 %v405
  %v1163 = vunpack.c.l.b16 %v406
  %v1164 = vunpack.c.l.b16 %v407
  %v1165 = vunpack.c.l.b16 %v408
  %v1166 = vunpack.c.l.b16 %v409
  %v1167 = vunpack.c.l.b16 %v410
  %v1168 = vunpack.c.l.b16 %v411
  %v1169 = vunpack.c.l.b16 %v412
  %v1170 = vunpack.c.l.b16 %v413
  %v1171 = vunpack.c.l.b16 %v414
  %v1172 = vunpack.c.l.b16 %v415
  %v1173 = vunpack.c.l.b16 %v416
  %v1174 = vunpack.c.l.b16 %v417
  %v1175 = vunpack.c.l.b16 %v418
  %v1176 = vunpack.c.l.b16 %v419
  %v1177 = vunpack.c.l.b16 %v420
  %v1178 = vunpack.c.l.b16 %v421
  %v1179 = vunpack.c.l.b16 %v422
  %v1180 = vunpack.c.l.b16 %v423
  %v1181 = vunpack.c.l.b16 %v424
  %v1182 = vunpack.c.l.b16 %v425
  %v1183 = vunpack.c.l.b16 %v426
  %v1184 = vunpack.c.l.b16 %v427
  %v1185 = vunpack.c.l.b16 %v428
  %v1186 = vunpack.c.l.b16 %v429
  %v1187 = vunpack.c.l.b16 %v430
  %v1188 = vunpack.c.l.b16 %v431
  %v1189 = vunpack.c.l.b16 %v432
  %v1190 = vunpack.c.l.b16 %v433
  %v1191 = vunpack.c.l.b16 %v434
  %v1192 = vunpack.c.l.b16 %v435
  %v1193 = vunpack.c.l.b16 %v436
  %v1194 = vunpack.c.l.b16 %v437
  %v1195 = vunpack.c.l.b16 %v438
  %v1196 = vunpack.c.l.b16 %v439
  %v1197 = vunpack.c.l.b16 %v440
  %v1198 = vunpack.c.l.b16 %v441
  %v1199 = vunpack.c.l.b16 %v442
  %v1200 = vunpack.c.l.b16 %v443
  %v1201 = vunpack.c.l.b16 %v444
  %v1202 = vpack.c.b16 %v825, %v824
  %v1203 = vpack.c.b16 %v827, %v826
  %v1204 = vpack.c.b16 %v829, %v828
  %v1205 = vpack.c.b16 %v831, %v830
  %v1206 = vpack.c.b16 %v833, %v832
  %v1207 = vpack.c.b16 %v835, %v834
  %v1208 = vpack.c.b16 %v837, %v836
  %v1209 = vpack.c.b16 %v839, %v838
  %v1210 = vpack.c.b16 %v841, %v840
  %v1211 = vpack.c.b16 %v843, %v842
  %v1212 = vpack.c.b16 %v845, %v844
  %v1213 = vpack.c.b16 %v847, %v846
  %v1214 = vpack.c.b16 %v849, %v848
  %v1215 = vpack.c.b16 %v851, %v850
  %v1216 = vpack.c.b16 %v853, %v852
  %v1217 = vpack.c.b16 %v855, %v854
  %v1218 = vpack.c.b16 %v857, %v856
  %v1219 = vpack.c.b16 %v859, %v858
  %v1220 = vpack.c.b16 %v861, %v860
  %v1221 = vpack.c.b16 %v863, %v862
  %v1222 = vpack.c.b16 %v865, %v864
  %v1223 = vpack.c.b16 %v867, %v866
  %v1224 = vpack.c.b16 %v869, %v868
  %v1225 = vpack.c.b16 %v871, %v870
  %v1226 = vpack.c.b16 %v873, %v872
  %v1227 = vpack.c.b16 %v875, %v874
  %v1228 = vpack.c.b16 %v877, %v876
  %v1229 = vpack.c.b16 %v879, %v878
  %v1230 = vpack.c.b16 %v881, %v880
  %v1231 = vpack.c.b16 %v883, %v882
  %v1232 = vpack.c.b16 %v885, %v884
  %v1233 = vpack.c.b16 %v887, %v886
  %v1234 = vpack.c.b16 %v889, %v888
  %v1235 = vpack.c.b16 %v891, %v890
  %v1236 = vpack.c.b16 %v893, %v892
  %v1237 = vpack.c.b16 %v895, %v894
  %v1238 = vpack.c.b16 %v897, %v896
  %v1239 = vpack.c.b16 %v899, %v898
  %v1240 = vpack.c.b16 %v901, %v900
  %v1241 = vpack.c.b16 %v903, %v902
  %v1242 = vpack.c.b16 %v905, %v904
  %v1243 = vpack.c.b16 %v907, %v906
  %v1244 = vpack.c.b16 %v909, %v908
  %v1245 = vpack.c.b16 %v911, %v910
  %v1246 = vpack.c.b16 %v913, %v912
  %v1247 = vpack.c.b16 %v915, %v914
  %v1248 = vpack.c.b16 %v917, %v916
  %v1249 = vpack.c.b16 %v919, %v918
  %v1250 = vpack.c.b16 %v921, %v920
  %v1251 = vpack.c.b16 %v923, %v922
  %v1252 = vpack.c.b16 %v925, %v924
  %v1253 = vpack.c.b16 %v927, %v926
  %v1254 = vpack.c.b16 %v929, %v928
  %v1255 = vpack.c.b16 %v931, %v930
  %v1256 = vpack.c.b16 %v933, %v932
  %v1257 = vpack.c.b16 %v935, %v934
  %v1258 = vpack.c.b16 %v937, %v936
  %v1259 = vpack.c.b16 %v939, %v938
  %v1260 = vpack.c.b16 %v941, %v940
  %v1261 = vpack.c.b16 %v943, %v942
  %v1262 = vpack.c.b16 %v945, %v944
  %v1263 = vpack.c.b16 %v947, %v946
  %v1264 = vpack.c.b16 %v949, %v948
  %v1265 = vpack.c.b16 %v951, %v950
  %v1266 = vpack.c.b16 %v953, %v952
  %v1267 = vpack.c.b16 %v955, %v954
  %v1268 = vpack.c.b16 %v957, %v956
  %v1269 = vpack.c.b16 %v959, %v958
  %v1270 = vpack.c.b16 %v961, %v960
  %v1271 = vpack.c.b16 %v963, %v962
  %v1272 = vpack.c.b16 %v965, %v964
  %v1273 = vpack.c.b16 %v967, %v966
  %v1274 = vpack.c.b16 %v969, %v968
  %v1275 = vpack.c.b16 %v971, %v970
  %v1276 = vpack.c.b16 %v973, %v972
  %v1277 = vpack.c.b16 %v975, %v974
  %v1278 = vpack.c.b16 %v977, %v976
  %v1279 = vpack.c.b16 %v979, %v978
  %v1280 = vpack.c.b16 %v981, %v980
  %v1281 = vpack.c.b16 %v983, %v982
  %v1282 = vpack.c.b16 %v985, %v984
  %v1283 = vpack.c.b16 %v987, %v986
  %v1284 = vpack.c.b16 %v989, %v988
  %v1285 = vpack.c.b16 %v991, %v990
  %v1286 = vpack.c.b16 %v993, %v992
  %v1287 = vpack.c.b16 %v995, %v994
  %v1288 = vpack.c.b16 %v997, %v996
  %v1289 = vpack.c.b16 %v999, %v998
  %v1290 = vpack.c.b16 %v1001, %v1000
  %v1291 = vpack.c.b16 %v1003, %v1002
  %v1292 = vpack.c.b16 %v1005, %v1004
  %v1293 = vpack.c.b16 %v1007, %v1006
  %v1294 = vpack.c.b16 %v1009, %v1008
  %v1295 = vpack.c.b16 %v1011, %v1010
  %v1296 = vpack.c.b16 %v1013, %v1012
  %v1297 = vpack.c.b16 %v1015, %v1014
  %v1298 = vpack.c.b16 %v1017, %v1016
  %v1299 = vpack.c.b16 %v1019, %v1018
  %v1300 = vpack.c.b16 %v1021, %v1020
  %v1301 = vpack.c.b16 %v1023, %v1022
  %v1302 = vpack.c.b16 %v1025, %v1024
  %v1303 = vpack.c.b16 %v1027, %v1026
  %v1304 = vpack.c.b16 %v1029, %v1028
  %v1305 = vpack.c.b16 %v1031, %v1030
  %v1306 = vpack.c.b16 %v1033, %v1032
  %v1307 = vpack.c.b16 %v1035, %v1034
  %v1308 = vpack.c.b16 %v1037, %v1036
  %v1309 = vpack.c.b16 %v1039, %v1038
  %v1310 = vpack.c.b16 %v1041, %v1040
  %v1311 = vpack.c.b16 %v1043, %v1042
  %v1312 = vpack.c.b16 %v1045, %v1044
  %v1313 = vpack.c.b16 %v1047, %v1046
  %v1314 = vpack.c.b16 %v1049, %v1048
  %v1315 = vpack.c.b16 %v1051, %v1050
  %v1316 = vpack.c.b16 %v1053, %v1052
  %v1317 = vpack.c.b16 %v1055, %v1054
  %v1318 = vpack.c.b16 %v1057, %v1056
  %v1319 = vpack.c.b16 %v1059, %v1058
  %v1320 = vpack.c.b16 %v1061, %v1060
  %v1321 = vpack.c.b16 %v1063, %v1062
  %v1322 = vpack.c.b16 %v1065, %v1064
  %v1323 = vpack.c.b16 %v1067, %v1066
  %v1324 = vpack.c.b16 %v1069, %v1068
  %v1325 = vpack.c.b16 %v1071, %v1070
  %v1326 = vpack.c.b16 %v1073, %v1072
  %v1327 = vpack.c.b16 %v1075, %v1074
  %v1328 = vpack.c.b16 %v1077, %v1076
  %v1329 = vpack.c.b16 %v1079, %v1078
  %v1330 = vpack.c.b16 %v1081, %v1080
  %v1331 = vpack.c.b16 %v1083, %v1082
  %v1332 = vpack.c.b16 %v1085, %v1084
  %v1333 = vpack.c.b16 %v1087, %v1086
  %v1334 = vpack.c.b16 %v1089, %v1088
  %v1335 = vpack.c.b16 %v1091, %v1090
  %v1336 = vpack.c.b16 %v1093, %v1092
  %v1337 = vpack.c.b16 %v1095, %v1094
  %v1338 = vpack.c.b16 %v1097, %v1096
  %v1339 = vpack.c.b16 %v1099, %v1098
  %v1340 = vpack.c.b16 %v1101, %v1100
  %v1341 = vpack.c.b16 %v1103, %v1102
  %v1342 = vpack.c.b16 %v1105, %v1104
  %v1343 = vpack.c.b16 %v1107, %v1106
  %v1344 = vpack.c.b16 %v1109, %v1108
  %v1345 = vpack.c.b16 %v1111, %v1110
  %v1346 = vpack.c.b16 %v1113, %v1112
  %v1347 = vpack.c.b16 %v1115, %v1114
  %v1348 = vpack.c.b16 %v1117, %v1116
  %v1349 = vpack.c.b16 %v1119, %v1118
  %v1350 = vpack.c.b16 %v1121, %v1120
  %v1351 = vpack.c.b16 %v1123, %v1122
  %v1352 = vpack.c.b16 %v1125, %v1124
  %v1353 = vpack.c.b16 %v1127, %v1126
  %v1354 = vpack.c.b16 %v1129, %v1128
  %v1355 = vpack.c.b16 %v1131, %v1130
  %v1356 = vpack.c.b16 %v1133, %v1132
  %v1357 = vpack.c.b16 %v1135, %v1134
  %v1358 = vpack.c.b16 %v1137, %v1136
  %v1359 = vpack.c.b16 %v1139, %v1138
  %v1360 = vpack.c.b16 %v1141, %v1140
  %v1361 = vpack.c.b16 %v1143, %v1142
  %v1362 = vpack.c.b16 %v1145, %v1144
  %v1363 = vpack.c.b16 %v1147, %v1146
  %v1364 = vpack.c.b16 %v1149, %v1148
  %v1365 = vpack.c.b16 %v1151, %v1150
  %v1366 = vpack.c.b16 %v1153, %v1152
  %v1367 = vpack.c.b16 %v1155, %v1154
  %v1368 = vpack.c.b16 %v1157, %v1156
  %v1369 = vpack.c.b16 %v1159, %v1158
  %v1370 = vpack.c.b16 %v1161, %v1160
  %v1371 = vpack.c.b16 %v1163, %v1162
  %v1372 = vpack.c.b16 %v1165, %v1164
  %v1373 = vpack.c.b16 %v1167, %v1166
  %v1374 = vpack.c.b16 %v1169, %v1168
  %v1375 = vpack.c.b16 %v1171, %v1170
  %v1376 = vpack.c.b16 %v1173, %v1172
  %v1377 = vpack.c.b16 %v1175, %v1174
  %v1378 = vpack.c.b16 %v1177, %v1176
  %v1379 = vpack.c.b16 %v1179, %v1178
  %v1380 = vpack.c.b16 %v1181, %v1180
  %v1381 = vpack.c.b16 %v1183, %v1182
  %v1382 = vpack.c.b16 %v1185, %v1184
  %v1383 = vpack.c.b16 %v1187, %v1186
  %v1384 = vpack.c.b16 %v1189, %v1188
  %v1385 = vpack.c.b16 %v1191, %v1190
  %v1386 = vpack.c.b16 %v1193, %v1192
  %v1387 = vpack.c.b16 %v1195, %v1194
  %v1388 = vpack.c.b16 %v1197, %v1196
  %v1389 = vpack.c.b16 %v1199, %v1198
  %v1390 = vpack.c.b16 %v1201, %v1200
  %vm1579 = vcmask 646144
  %v1581 = vsel %vm1579, %v66, 0
  %vm1583 = vcmask 1046528
  %vm1584 = vcmask 1047552
  %v1585 = vsel %vm1583, 4294967295, 65535
  %v1586 = vsel %vm1584, %v1585, 0
  %v1588 = vand.u32 %v1390, %v1586
  %1590 = vmatpush.bf16.msra.mxu0 %v1209
  %1591 = vmatpush.bf16.msra.mxu0 %v1208
  %1592 = vmatpush.bf16.msra.mxu0 %v1207
  %1593 = vmatpush.bf16.msra.mxu0 %v1206
  %1594 = vmatpush.bf16.msra.mxu0 %v1205
  %1595 = vmatpush.bf16.msra.mxu0 %v1204
  %1596 = vmatpush.bf16.msra.mxu0 %v1203
  %1597 = vmatpush.bf16.msra.mxu0 %v1202
  %1598 = vmatmul.bf16.gmra.mxu0 %v43
  %v1599 = vpop.f32.mrf.mxu0
  %v1600 = vadd.f32 %v445, %v1599
  %v1601 = vpop.f32.mrf.mxu0
  %1602 = vdwg.mxu0
  %1603 = vmatpush.bf16.msra.mxu0 %v1217
  %1604 = vmatpush.bf16.msra.mxu0 %v1216
  %1605 = vmatpush.bf16.msra.mxu0 %v1215
  %1606 = vmatpush.bf16.msra.mxu0 %v1214
  %1607 = vmatpush.bf16.msra.mxu0 %v1213
  %1608 = vmatpush.bf16.msra.mxu0 %v1212
  %1609 = vmatpush.bf16.msra.mxu0 %v1211
  %1610 = vmatpush.bf16.msra.mxu0 %v1210
  %1611 = vmatmul.bf16.gmra.mxu0 %v44
  %v1612 = vpop.f32.mrf.mxu0
  %v1613 = vadd.f32 %v1600, %v1612
  %v1614 = vpop.f32.mrf.mxu0
  %1615 = vdwg.mxu0
  %1616 = vmatpush.bf16.msra.mxu0 %v1225
  %1617 = vmatpush.bf16.msra.mxu0 %v1224
  %1618 = vmatpush.bf16.msra.mxu0 %v1223
  %1619 = vmatpush.bf16.msra.mxu0 %v1222
  %1620 = vmatpush.bf16.msra.mxu0 %v1221
  %1621 = vmatpush.bf16.msra.mxu0 %v1220
  %1622 = vmatpush.bf16.msra.mxu0 %v1219
  %1623 = vmatpush.bf16.msra.mxu0 %v1218
  %1624 = vmatmul.bf16.gmra.mxu0 %v45
  %v1625 = vpop.f32.mrf.mxu0
  %v1626 = vadd.f32 %v1613, %v1625
  %v1627 = vpop.f32.mrf.mxu0
  %1628 = vdwg.mxu0
  %1629 = vmatpush.bf16.msra.mxu0 %v1233
  %1630 = vmatpush.bf16.msra.mxu0 %v1232
  %1631 = vmatpush.bf16.msra.mxu0 %v1231
  %1632 = vmatpush.bf16.msra.mxu0 %v1230
  %1633 = vmatpush.bf16.msra.mxu0 %v1229
  %1634 = vmatpush.bf16.msra.mxu0 %v1228
  %1635 = vmatpush.bf16.msra.mxu0 %v1227
  %1636 = vmatpush.bf16.msra.mxu0 %v1226
  %1637 = vmatmul.bf16.gmra.mxu0 %v46
  %v1638 = vpop.f32.mrf.mxu0
  %v1639 = vadd.f32 %v1626, %v1638
  %v1640 = vpop.f32.mrf.mxu0
  %1641 = vdwg.mxu0
  %1642 = vmatpush.bf16.msra.mxu0 %v1241
  %1643 = vmatpush.bf16.msra.mxu0 %v1240
  %1644 = vmatpush.bf16.msra.mxu0 %v1239
  %1645 = vmatpush.bf16.msra.mxu0 %v1238
  %1646 = vmatpush.bf16.msra.mxu0 %v1237
  %1647 = vmatpush.bf16.msra.mxu0 %v1236
  %1648 = vmatpush.bf16.msra.mxu0 %v1235
  %1649 = vmatpush.bf16.msra.mxu0 %v1234
  %1650 = vmatmul.bf16.gmra.mxu0 %v47
  %v1651 = vpop.f32.mrf.mxu0
  %v1652 = vadd.f32 %v1639, %v1651
  %v1653 = vpop.f32.mrf.mxu0
  %1654 = vdwg.mxu0
  %1655 = vmatpush.bf16.msra.mxu0 %v1249
  %1656 = vmatpush.bf16.msra.mxu0 %v1248
  %1657 = vmatpush.bf16.msra.mxu0 %v1247
  %1658 = vmatpush.bf16.msra.mxu0 %v1246
  %1659 = vmatpush.bf16.msra.mxu0 %v1245
  %1660 = vmatpush.bf16.msra.mxu0 %v1244
  %1661 = vmatpush.bf16.msra.mxu0 %v1243
  %1662 = vmatpush.bf16.msra.mxu0 %v1242
  %1663 = vmatmul.bf16.gmra.mxu0 %v48
  %v1664 = vpop.f32.mrf.mxu0
  %v1665 = vadd.f32 %v1652, %v1664
  %v1666 = vpop.f32.mrf.mxu0
  %1667 = vdwg.mxu0
  %1668 = vmatpush.bf16.msra.mxu0 %v1257
  %1669 = vmatpush.bf16.msra.mxu0 %v1256
  %1670 = vmatpush.bf16.msra.mxu0 %v1255
  %1671 = vmatpush.bf16.msra.mxu0 %v1254
  %1672 = vmatpush.bf16.msra.mxu0 %v1253
  %1673 = vmatpush.bf16.msra.mxu0 %v1252
  %1674 = vmatpush.bf16.msra.mxu0 %v1251
  %1675 = vmatpush.bf16.msra.mxu0 %v1250
  %1676 = vmatmul.bf16.gmra.mxu0 %v49
  %v1677 = vpop.f32.mrf.mxu0
  %v1678 = vadd.f32 %v1665, %v1677
  %v1679 = vpop.f32.mrf.mxu0
  %1680 = vdwg.mxu0
  %1681 = vmatpush.bf16.msra.mxu0 %v1265
  %1682 = vmatpush.bf16.msra.mxu0 %v1264
  %1683 = vmatpush.bf16.msra.mxu0 %v1263
  %1684 = vmatpush.bf16.msra.mxu0 %v1262
  %1685 = vmatpush.bf16.msra.mxu0 %v1261
  %1686 = vmatpush.bf16.msra.mxu0 %v1260
  %1687 = vmatpush.bf16.msra.mxu0 %v1259
  %1688 = vmatpush.bf16.msra.mxu0 %v1258
  %1689 = vmatmul.bf16.gmra.mxu0 %v50
  %v1690 = vpop.f32.mrf.mxu0
  %v1691 = vadd.f32 %v1678, %v1690
  %v1692 = vpop.f32.mrf.mxu0
  %1693 = vdwg.mxu0
  %1694 = vmatpush.bf16.msra.mxu0 %v1273
  %1695 = vmatpush.bf16.msra.mxu0 %v1272
  %1696 = vmatpush.bf16.msra.mxu0 %v1271
  %1697 = vmatpush.bf16.msra.mxu0 %v1270
  %1698 = vmatpush.bf16.msra.mxu0 %v1269
  %1699 = vmatpush.bf16.msra.mxu0 %v1268
  %1700 = vmatpush.bf16.msra.mxu0 %v1267
  %1701 = vmatpush.bf16.msra.mxu0 %v1266
  %1702 = vmatmul.bf16.gmra.mxu0 %v51
  %v1703 = vpop.f32.mrf.mxu0
  %v1704 = vadd.f32 %v1691, %v1703
  %v1705 = vpop.f32.mrf.mxu0
  %1706 = vdwg.mxu0
  %1707 = vmatpush.bf16.msra.mxu0 %v1281
  %1708 = vmatpush.bf16.msra.mxu0 %v1280
  %1709 = vmatpush.bf16.msra.mxu0 %v1279
  %1710 = vmatpush.bf16.msra.mxu0 %v1278
  %1711 = vmatpush.bf16.msra.mxu0 %v1277
  %1712 = vmatpush.bf16.msra.mxu0 %v1276
  %1713 = vmatpush.bf16.msra.mxu0 %v1275
  %1714 = vmatpush.bf16.msra.mxu0 %v1274
  %1715 = vmatmul.bf16.gmra.mxu0 %v52
  %v1716 = vpop.f32.mrf.mxu0
  %v1717 = vadd.f32 %v1704, %v1716
  %v1718 = vpop.f32.mrf.mxu0
  %1719 = vdwg.mxu0
  %1720 = vmatpush.bf16.msra.mxu0 %v1289
  %1721 = vmatpush.bf16.msra.mxu0 %v1288
  %1722 = vmatpush.bf16.msra.mxu0 %v1287
  %1723 = vmatpush.bf16.msra.mxu0 %v1286
  %1724 = vmatpush.bf16.msra.mxu0 %v1285
  %1725 = vmatpush.bf16.msra.mxu0 %v1284
  %1726 = vmatpush.bf16.msra.mxu0 %v1283
  %1727 = vmatpush.bf16.msra.mxu0 %v1282
  %1728 = vmatmul.bf16.gmra.mxu0 %v53
  %v1729 = vpop.f32.mrf.mxu0
  %v1730 = vadd.f32 %v1717, %v1729
  %v1731 = vpop.f32.mrf.mxu0
  %1732 = vdwg.mxu0
  %1733 = vmatpush.bf16.msra.mxu0 %v1297
  %1734 = vmatpush.bf16.msra.mxu0 %v1296
  %1735 = vmatpush.bf16.msra.mxu0 %v1295
  %1736 = vmatpush.bf16.msra.mxu0 %v1294
  %1737 = vmatpush.bf16.msra.mxu0 %v1293
  %1738 = vmatpush.bf16.msra.mxu0 %v1292
  %1739 = vmatpush.bf16.msra.mxu0 %v1291
  %1740 = vmatpush.bf16.msra.mxu0 %v1290
  %1741 = vmatmul.bf16.gmra.mxu0 %v54
  %v1742 = vpop.f32.mrf.mxu0
  %v1743 = vadd.f32 %v1730, %v1742
  %v1744 = vpop.f32.mrf.mxu0
  %1745 = vdwg.mxu0
  %1746 = vmatpush.bf16.msra.mxu0 %v1305
  %1747 = vmatpush.bf16.msra.mxu0 %v1304
  %1748 = vmatpush.bf16.msra.mxu0 %v1303
  %1749 = vmatpush.bf16.msra.mxu0 %v1302
  %1750 = vmatpush.bf16.msra.mxu0 %v1301
  %1751 = vmatpush.bf16.msra.mxu0 %v1300
  %1752 = vmatpush.bf16.msra.mxu0 %v1299
  %1753 = vmatpush.bf16.msra.mxu0 %v1298
  %1754 = vmatmul.bf16.gmra.mxu0 %v55
  %v1755 = vpop.f32.mrf.mxu0
  %v1756 = vadd.f32 %v1743, %v1755
  %v1757 = vpop.f32.mrf.mxu0
  %1758 = vdwg.mxu0
  %1759 = vmatpush.bf16.msra.mxu0 %v1313
  %1760 = vmatpush.bf16.msra.mxu0 %v1312
  %1761 = vmatpush.bf16.msra.mxu0 %v1311
  %1762 = vmatpush.bf16.msra.mxu0 %v1310
  %1763 = vmatpush.bf16.msra.mxu0 %v1309
  %1764 = vmatpush.bf16.msra.mxu0 %v1308
  %1765 = vmatpush.bf16.msra.mxu0 %v1307
  %1766 = vmatpush.bf16.msra.mxu0 %v1306
  %1767 = vmatmul.bf16.gmra.mxu0 %v56
  %v1768 = vpop.f32.mrf.mxu0
  %v1769 = vadd.f32 %v1756, %v1768
  %v1770 = vpop.f32.mrf.mxu0
  %1771 = vdwg.mxu0
  %1772 = vmatpush.bf16.msra.mxu0 %v1321
  %1773 = vmatpush.bf16.msra.mxu0 %v1320
  %1774 = vmatpush.bf16.msra.mxu0 %v1319
  %1775 = vmatpush.bf16.msra.mxu0 %v1318
  %1776 = vmatpush.bf16.msra.mxu0 %v1317
  %1777 = vmatpush.bf16.msra.mxu0 %v1316
  %1778 = vmatpush.bf16.msra.mxu0 %v1315
  %1779 = vmatpush.bf16.msra.mxu0 %v1314
  %1780 = vmatmul.bf16.gmra.mxu0 %v57
  %v1781 = vpop.f32.mrf.mxu0
  %v1782 = vadd.f32 %v1769, %v1781
  %v1783 = vpop.f32.mrf.mxu0
  %1784 = vdwg.mxu0
  %1785 = vmatpush.bf16.msra.mxu0 %v1329
  %1786 = vmatpush.bf16.msra.mxu0 %v1328
  %1787 = vmatpush.bf16.msra.mxu0 %v1327
  %1788 = vmatpush.bf16.msra.mxu0 %v1326
  %1789 = vmatpush.bf16.msra.mxu0 %v1325
  %1790 = vmatpush.bf16.msra.mxu0 %v1324
  %1791 = vmatpush.bf16.msra.mxu0 %v1323
  %1792 = vmatpush.bf16.msra.mxu0 %v1322
  %1793 = vmatmul.bf16.gmra.mxu0 %v58
  %v1794 = vpop.f32.mrf.mxu0
  %v1795 = vadd.f32 %v1782, %v1794
  %v1796 = vpop.f32.mrf.mxu0
  %1797 = vdwg.mxu0
  %1798 = vmatpush.bf16.msra.mxu0 %v1337
  %1799 = vmatpush.bf16.msra.mxu0 %v1336
  %1800 = vmatpush.bf16.msra.mxu0 %v1335
  %1801 = vmatpush.bf16.msra.mxu0 %v1334
  %1802 = vmatpush.bf16.msra.mxu0 %v1333
  %1803 = vmatpush.bf16.msra.mxu0 %v1332
  %1804 = vmatpush.bf16.msra.mxu0 %v1331
  %1805 = vmatpush.bf16.msra.mxu0 %v1330
  %1806 = vmatmul.bf16.gmra.mxu0 %v59
  %v1807 = vpop.f32.mrf.mxu0
  %v1808 = vadd.f32 %v1795, %v1807
  %v1809 = vpop.f32.mrf.mxu0
  %1810 = vdwg.mxu0
  %1811 = vmatpush.bf16.msra.mxu0 %v1345
  %1812 = vmatpush.bf16.msra.mxu0 %v1344
  %1813 = vmatpush.bf16.msra.mxu0 %v1343
  %1814 = vmatpush.bf16.msra.mxu0 %v1342
  %1815 = vmatpush.bf16.msra.mxu0 %v1341
  %1816 = vmatpush.bf16.msra.mxu0 %v1340
  %1817 = vmatpush.bf16.msra.mxu0 %v1339
  %1818 = vmatpush.bf16.msra.mxu0 %v1338
  %1819 = vmatmul.bf16.gmra.mxu0 %v60
  %v1820 = vpop.f32.mrf.mxu0
  %v1821 = vadd.f32 %v1808, %v1820
  %v1822 = vpop.f32.mrf.mxu0
  %1823 = vdwg.mxu0
  %1824 = vmatpush.bf16.msra.mxu0 %v1353
  %1825 = vmatpush.bf16.msra.mxu0 %v1352
  %1826 = vmatpush.bf16.msra.mxu0 %v1351
  %1827 = vmatpush.bf16.msra.mxu0 %v1350
  %1828 = vmatpush.bf16.msra.mxu0 %v1349
  %1829 = vmatpush.bf16.msra.mxu0 %v1348
  %1830 = vmatpush.bf16.msra.mxu0 %v1347
  %1831 = vmatpush.bf16.msra.mxu0 %v1346
  %1832 = vmatmul.bf16.gmra.mxu0 %v61
  %v1833 = vpop.f32.mrf.mxu0
  %v1834 = vadd.f32 %v1821, %v1833
  %v1835 = vpop.f32.mrf.mxu0
  %1836 = vdwg.mxu0
  %1837 = vmatpush.bf16.msra.mxu0 %v1361
  %1838 = vmatpush.bf16.msra.mxu0 %v1360
  %1839 = vmatpush.bf16.msra.mxu0 %v1359
  %1840 = vmatpush.bf16.msra.mxu0 %v1358
  %1841 = vmatpush.bf16.msra.mxu0 %v1357
  %1842 = vmatpush.bf16.msra.mxu0 %v1356
  %1843 = vmatpush.bf16.msra.mxu0 %v1355
  %1844 = vmatpush.bf16.msra.mxu0 %v1354
  %1845 = vmatmul.bf16.gmra.mxu0 %v62
  %v1846 = vpop.f32.mrf.mxu0
  %v1847 = vadd.f32 %v1834, %v1846
  %v1848 = vpop.f32.mrf.mxu0
  %1849 = vdwg.mxu0
  %1850 = vmatpush.bf16.msra.mxu0 %v1369
  %1851 = vmatpush.bf16.msra.mxu0 %v1368
  %1852 = vmatpush.bf16.msra.mxu0 %v1367
  %1853 = vmatpush.bf16.msra.mxu0 %v1366
  %1854 = vmatpush.bf16.msra.mxu0 %v1365
  %1855 = vmatpush.bf16.msra.mxu0 %v1364
  %1856 = vmatpush.bf16.msra.mxu0 %v1363
  %1857 = vmatpush.bf16.msra.mxu0 %v1362
  %1858 = vmatmul.bf16.gmra.mxu0 %v63
  %v1859 = vpop.f32.mrf.mxu0
  %v1860 = vadd.f32 %v1847, %v1859
  %v1861 = vpop.f32.mrf.mxu0
  %1862 = vdwg.mxu0
  %1863 = vmatpush.bf16.msra.mxu0 %v1377
  %1864 = vmatpush.bf16.msra.mxu0 %v1376
  %1865 = vmatpush.bf16.msra.mxu0 %v1375
  %1866 = vmatpush.bf16.msra.mxu0 %v1374
  %1867 = vmatpush.bf16.msra.mxu0 %v1373
  %1868 = vmatpush.bf16.msra.mxu0 %v1372
  %1869 = vmatpush.bf16.msra.mxu0 %v1371
  %1870 = vmatpush.bf16.msra.mxu0 %v1370
  %1871 = vmatmul.bf16.gmra.mxu0 %v64
  %v1872 = vpop.f32.mrf.mxu0
  %v1873 = vadd.f32 %v1860, %v1872
  %v1874 = vpop.f32.mrf.mxu0
  %1875 = vdwg.mxu0
  %1876 = vmatpush.bf16.msra.mxu0 %v1385
  %1877 = vmatpush.bf16.msra.mxu0 %v1384
  %1878 = vmatpush.bf16.msra.mxu0 %v1383
  %1879 = vmatpush.bf16.msra.mxu0 %v1382
  %1880 = vmatpush.bf16.msra.mxu0 %v1381
  %1881 = vmatpush.bf16.msra.mxu0 %v1380
  %1882 = vmatpush.bf16.msra.mxu0 %v1379
  %1883 = vmatpush.bf16.msra.mxu0 %v1378
  %1884 = vmatmul.bf16.gmra.mxu0 %v65
  %v1885 = vpop.f32.mrf.mxu0
  %v1886 = vadd.f32 %v1873, %v1885
  %v1887 = vpop.f32.mrf.mxu0
  %1888 = vdwg.mxu0
  %1889 = vmatpush.bf16.msra.mxu0 0
  %1890 = vmatpush.bf16.msra.mxu0 0
  %1891 = vmatpush.bf16.msra.mxu0 0
  %1892 = vmatpush.bf16.msra.mxu0 %v1588
  %1893 = vmatpush.bf16.msra.mxu0 %v1389
  %1894 = vmatpush.bf16.msra.mxu0 %v1388
  %1895 = vmatpush.bf16.msra.mxu0 %v1387
  %1896 = vmatpush.bf16.msra.mxu0 %v1386
  %1897 = vmatmul.bf16.gmra.mxu0 %v1581
  %v1898 = vpop.f32.mrf.mxu0
  %v1899 = vadd.f32 %v1886, %v1898
  %v1900 = vpop.f32.mrf.mxu0
  %1901 = vdwg.mxu0
  %v1902 = vmax.f32 %v1899, 0.0
  %vm1903 = vcmask 523264
  %v1904 = vsel %vm1903, %v1902, 0.0
  %v1905 = vrot.slane %v1904, 4
  %v1906 = vadd.f32 %v1904, %v1905
  %v1907 = vrot.slane %v1906, 2
  %v1908 = vadd.f32 %v1906, %v1907
  %v1909 = vrot.slane %v1908, 1
  %v1910 = vadd.f32 %v1908, %v1909
  %v1911 = vrcp.pop 8.0
  %v1912 = vmul.f32 8.0, %v1911
  %v1913 = vsub.f32 1.0, %v1912
  %v1914 = vmul.f32 %v1911, %v1913
  %v1915 = vadd.f32 %v1911, %v1914
  %vm1916 = vweird.f32 %v1911
  %v1917 = vsel %vm1916, %v1911, %v1915
  %v1918 = vmul.f32 %v1910, %v1917
  %v1919 = vsub.f32 %v1902, %v1918
  %v1920 = vmul.f32 %v1919, %v1919
  %v1921 = vsel %vm1903, %v1920, 0.0
  %v1922 = vrot.slane %v1921, 4
  %v1923 = vadd.f32 %v1921, %v1922
  %v1924 = vrot.slane %v1923, 2
  %v1925 = vadd.f32 %v1923, %v1924
  %v1926 = vrot.slane %v1925, 1
  %v1927 = vadd.f32 %v1925, %v1926
  %v1928 = vmul.f32 %v1927, %v1917
  %v1929 = vperm.slane %v18, 1
  %v1930 = vmul.f32 %v1929, %v1919
  %v1931 = vadd.f32 %v1928, 1e-05
  %v1932 = vrsqrt.pop %v1931
  %v1933 = vmul.f32 %v1932, %v1931
  %v1934 = vmul.f32 %v1933, %v1932
  %v1935 = vmul.f32 0.5, %v1934
  %v1936 = vsub.f32 1.5, %v1935
  %v1937 = vmul.f32 %v1932, %v1936
  %vm1938 = vweird.f32 %v1931
  %vm1939 = vweird.f32 %v1932
  %vm1940 = vmor %vm1938, %vm1939
  %v1941 = vsel %vm1940, %v1932, %v1937
  %v1942 = vmul.f32 %v1930, %v1941
  %v1943 = vperm.slane %v18, 2
  %v1944 = vadd.f32 %v1942, %v1943
  %v1945 = vld [vmem:[%s2] sm:$0xff]
  %v1946 = vld [vmem:[%s2 + $0x8] sm:$0xff]
  %v1947 = vld [vmem:[%s2 + $0x10] sm:$0xff]
  %v1948 = vld [vmem:[%s2 + $0x18] sm:$0xff]
  %v1949 = vld [vmem:[%s2 + $0x20] sm:$0xff]
  %v1950 = vld [vmem:[%s2 + $0x28] sm:$0xff]
  %v1951 = vld [vmem:[%s2 + $0x30] sm:$0xff]
  %v1952 = vld [vmem:[%s2 + $0x38] sm:$0xff]
  %v1953 = vperm.slane %v18, 3
  %v1955 = vsel %vm1903, %v1944, 0
  %1957 = vmatpush.msra.mxu0 0.0
  %1958 = vmatpush.msra.mxu0 0.0
  %1959 = vmatpush.msra.mxu0 0.0
  %1960 = vmatpush.msra.mxu0 0.0
  %1961 = vmatpush.msra.mxu0 0.0
  %1962 = vmatpush.msra.mxu0 0.0
  %1963 = vmatpush.msra.mxu0 0.0
  %1964 = vmatpush.msra.mxu0 0.0
  %1965 = vmatpush.msra.mxu0 %v1952
  %1966 = vmatpush.msra.mxu0 %v1951
  %1967 = vmatpush.msra.mxu0 %v1950
  %1968 = vmatpush.msra.mxu0 %v1949
  %1969 = vmatpush.msra.mxu0 %v1948
  %1970 = vmatpush.msra.mxu0 %v1947
  %1971 = vmatpush.msra.mxu0 %v1946
  %1972 = vmatpush.msra.mxu0 %v1945
  %1973 = vmatmul.f32.gmra.mxu0 %v1955
  %v1974 = vpop.f32.mrf.mxu0
  %v1975 = vadd.f32 %v1953, %v1974
  %1976 = vdwg.mxu0
  %v1977 = vmax.f32 %v1975, 0.0
  %v1978 = vsel %vm1903, %v1977, 0.0
  %v1979 = vrot.slane %v1978, 4
  %v1980 = vadd.f32 %v1978, %v1979
  %v1981 = vrot.slane %v1980, 2
  %v1982 = vadd.f32 %v1980, %v1981
  %v1983 = vrot.slane %v1982, 1
  %v1984 = vadd.f32 %v1982, %v1983
  %v1985 = vmul.f32 %v1984, %v1917
  %v1986 = vsub.f32 %v1977, %v1985
  %v1987 = vmul.f32 %v1986, %v1986
  %v1988 = vsel %vm1903, %v1987, 0.0
  %v1989 = vrot.slane %v1988, 4
  %v1990 = vadd.f32 %v1988, %v1989
  %v1991 = vrot.slane %v1990, 2
  %v1992 = vadd.f32 %v1990, %v1991
  %v1993 = vrot.slane %v1992, 1
  %v1994 = vadd.f32 %v1992, %v1993
  %v1995 = vmul.f32 %v1994, %v1917
  %v1996 = vperm.slane %v18, 4
  %v1997 = vmul.f32 %v1996, %v1986
  %v1998 = vadd.f32 %v1995, 1e-05
  %v1999 = vrsqrt.pop %v1998
  %v2000 = vmul.f32 %v1999, %v1998
  %v2001 = vmul.f32 %v2000, %v1999
  %v2002 = vmul.f32 0.5, %v2001
  %v2003 = vsub.f32 1.5, %v2002
  %v2004 = vmul.f32 %v1999, %v2003
  %vm2005 = vweird.f32 %v1998
  %vm2006 = vweird.f32 %v1999
  %vm2007 = vmor %vm2005, %vm2006
  %v2008 = vsel %vm2007, %v1999, %v2004
  %v2009 = vmul.f32 %v1997, %v2008
  %v2010 = vperm.slane %v18, 5
  %v2011 = vadd.f32 %v2009, %v2010
  %v2012 = vperm.slane %v18, 6
  %v2013 = vmul.f32 %v2011, %v2012
  %v2014 = vsel %vm1903, %v2013, 0.0
  %2015 = vadd.xlane.f32.xlu0 %v2014
  %v2016 = vpop.xlane.xlu0 %2015
  %v2017 = vperm.slane %v18, 7
  %v2018 = vadd.f32 %v2016, %v2017
  %vm2019 = vcmask 7168
  %2020 = vst.msk [vmem:[%s4] sm:$0xff] %vm2019, %v2018
  // Predicated region
  $region18: #{value_network_forward.1} parent=0 // pred_check
    _
  $region19: #{value_network_forward.1} parent=0 // pred_check_branch
    %2022 = sbr.rel (0) target = $region21
  $region20: #{value_network_forward.1} parent=0 // pred_region
    _
  $region21: #{value_network_forward.1} parent=0 // pred_fallthru
    _
  // Predicated region
  $region22: #{value_network_forward.1} parent=0 // pred_check
    _
  $region23: #{value_network_forward.1} parent=0 // pred_check_branch
    %2024 = sbr.rel (0) target = $region25
  $region24: #{value_network_forward.1} parent=0 // pred_region
    _
  $region25: #{value_network_forward.1} parent=0 // pred_fallthru
    _

</llo_original>
